<compile_context>
chip_gen: v7x
topology: tpu7x:2x2x1
jax: 0.10.0
libtpu: 0.0.40
codegen_flags: <defaults>
</compile_context>

<pallas_src>
import functools

import jax
import jax.numpy as jnp
from jax.experimental import pallas as pl
from jax.experimental.pallas import tpu as pltpu

KSIZE = 7
PAD = 3


def _round_up(v, m):
    return ((v + m - 1) // m) * m


def _spatial_attn_kernel(w_ref, b_ref, x_ref, o_ref, mean_pad, max_pad,
                         *, bn, C, H, W, HP, WP, band_rows, c_chunk):
    # w_ref : SMEM (2*7*7,) flattened conv weight, index [in_ch*49 + ky*7 + kx]
    # b_ref : SMEM (1,)     conv bias
    # x_ref : VMEM (bn, C, H*W)  lane-dense input block
    # o_ref : VMEM (bn, C, H*W)
    # mean_pad / max_pad : VMEM (bn, HP, WP) zero-padded channel-reduced maps
    HW = H * W

    # Hoist all 98 SMEM weight reads (+ bias) out of the unrolled conv loops.
    w_mean = [[w_ref[dy * KSIZE + dx] for dx in range(KSIZE)]
              for dy in range(KSIZE)]
    w_max = [[w_ref[KSIZE * KSIZE + dy * KSIZE + dx] for dx in range(KSIZE)]
             for dy in range(KSIZE)]
    bias = b_ref[0]

    # ---- Pass 1: channel mean / max, chunked over C (no persistent f32 copy
    # of the whole x block stays live).
    sum_acc = None
    max_acc = None
    for c0 in range(0, C, c_chunk):
        cc = min(c_chunk, C - c0)
        xc = x_ref[:, c0:c0 + cc, :].astype(jnp.float32)     # (bn, cc, HW)
        s = jnp.sum(xc, axis=1)
        m = jnp.max(xc, axis=1)
        if sum_acc is None:
            sum_acc, max_acc = s, m
        else:
            sum_acc = sum_acc + s
            max_acc = jnp.maximum(max_acc, m)
    mean_map = (sum_acc * (1.0 / C)).reshape(bn, H, W)
    max_map = max_acc.reshape(bn, H, W)

    # ---- Refresh the padded scratch. Only the halo is re-zeroed each step
    # (the interior rows/lanes < W are fully overwritten below). Lanes >= W
    # MUST stay zero: the roll-based conv wraps into them.
    ztop = jnp.zeros((bn, PAD, WP), jnp.float32)
    mean_pad[:, 0:PAD, :] = ztop
    max_pad[:, 0:PAD, :] = ztop
    nbot = HP - (PAD + H)
    if nbot > 0:
        zbot = jnp.zeros((bn, nbot, WP), jnp.float32)
        mean_pad[:, PAD + H:HP, :] = zbot
        max_pad[:, PAD + H:HP, :] = zbot
    if WP > W:
        zright = jnp.zeros((bn, H, WP - W), jnp.float32)
        mean_pad[:, PAD:PAD + H, W:WP] = zright
        max_pad[:, PAD:PAD + H, W:WP] = zright
    mean_pad[:, PAD:PAD + H, 0:W] = mean_map
    max_pad[:, PAD:PAD + H, 0:W] = max_map

    # ---- Pass 2: 7x7 conv (2 in-ch -> 1 out-ch, stride 1, pad 3), statically
    # unrolled. Row-banded so acc_m/acc_x stay register resident; the dx shift
    # is a single lane-roll per map per dx (hoisted out of the dy loop); dy is
    # a cheap sublane slice. Columns >= W and lane wrap-around land on the
    # zero padding, so every tap is a full-width unmasked FMA.
    attn_bands = []
    for r0 in range(0, H, band_rows):
        rh = min(band_rows, H - r0)
        m_band = mean_pad[:, r0:r0 + rh + KSIZE - 1, :]       # (bn, rh+6, WP)
        x_band = max_pad[:, r0:r0 + rh + KSIZE - 1, :]
        acc_m = jnp.zeros((bn, rh, WP), jnp.float32)
        acc_x = jnp.zeros((bn, rh, WP), jnp.float32)
        for dx in range(KSIZE):
            shift = (PAD - dx) % WP   # output col w reads input col w+dx-3
            m_rot = m_band if shift == 0 else pltpu.roll(m_band, shift=shift, axis=2)
            x_rot = x_band if shift == 0 else pltpu.roll(x_band, shift=shift, axis=2)
            for dy in range(KSIZE):
                acc_m = acc_m + w_mean[dy][dx] * m_rot[:, dy:dy + rh, :]
                acc_x = acc_x + w_max[dy][dx] * x_rot[:, dy:dy + rh, :]
        conv = acc_m + acc_x + bias                           # (bn, rh, WP)
        attn_bands.append(jax.nn.sigmoid(conv[:, :, 0:W]))    # (bn, rh, W)

    attn = attn_bands[0] if len(attn_bands) == 1 else jnp.concatenate(attn_bands, axis=1)
    attn = attn.reshape(bn, 1, HW).astype(x_ref.dtype)

    # ---- Pass 3: lane-dense broadcast scale, chunked over C, re-reading
    # x_ref directly (no extra full-block temp), full-width stores.
    for c0 in range(0, C, c_chunk):
        cc = min(c_chunk, C - c0)
        o_ref[:, c0:c0 + cc, :] = (attn * x_ref[:, c0:c0 + cc, :]).astype(o_ref.dtype)


def self_attention_block(x, conv_w, conv_b):
    """x: (N, C, H, W); conv_w: (1, 2, 7, 7); conv_b: (1,)."""
    N, C, H, W = x.shape
    HW = H * W

    # Lane-dense view for the reduction / scale passes (free, contiguous).
    x_flat = x.reshape(N, C, HW)

    # Per-generation VMEM budgeting: derive from the chip when possible.
    try:
        vmem_cap = int(getattr(pltpu.get_tpu_info(), "vmem_capacity_bytes",
                               64 * 1024 * 1024))
    except Exception:
        vmem_cap = 64 * 1024 * 1024
    vmem_limit = min(64 * 1024 * 1024, max(16 * 1024 * 1024, vmem_cap // 2))
    # ~4 MiB x blocks on 128 MiB parts (v5e/v6e), ~2 MiB on 64 MiB parts (v7x).
    block_budget = (4 << 20) if vmem_cap >= (100 << 20) else (2 << 20)

    # Pick bn: keep the x block within budget AND keep >= min(N, 4) grid steps
    # so the BlockSpec pipeline overlaps DMA with compute and the "parallel"
    # axis can be sharded across both v7x TensorCores.
    bytes_per_image = max(1, C * HW * x.dtype.itemsize)
    bn = max(1, min(N, block_budget // bytes_per_image))
    min_steps = min(N, 4)
    while bn > 1 and N // bn < min_steps:
        bn -= 1
    while N % bn:
        bn -= 1
    grid_steps = N // bn
    # TODO(synk): for N == 1 with large images, add a parallel H-tiling grid
    # axis with a 3-row halo so the second v7x TensorCore gets work.

    HP = _round_up(H + 2 * PAD, 8)      # padded rows per image (>= H + 6)
    WP = _round_up(W + PAD, 128)        # lane-padded width     (>= W + 3)
    band_rows = min(H, 16)              # conv accumulators stay vreg-resident
    c_chunk = min(C, 8)

    w_flat = conv_w.reshape(-1).astype(jnp.float32)       # [c*49 + ky*7 + kx]
    b = conv_b.reshape(-1).astype(jnp.float32)

    kernel = functools.partial(_spatial_attn_kernel, bn=bn, C=C, H=H, W=W,
                               HP=HP, WP=WP, band_rows=band_rows,
                               c_chunk=c_chunk)

    x_spec = pl.BlockSpec((bn, C, HW), lambda n: (n, 0, 0))
    o_spec = pl.BlockSpec((bn, C, HW), lambda n: (n, 0, 0))
    if grid_steps >= 3 and hasattr(pl, "Buffered"):
        # Deeper pipelining hides DMA setup latency on this HBM-bound kernel.
        x_spec = pl.BlockSpec((bn, C, HW), lambda n: (n, 0, 0),
                              pipeline_mode=pl.Buffered(3))
        o_spec = pl.BlockSpec((bn, C, HW), lambda n: (n, 0, 0),
                              pipeline_mode=pl.Buffered(3))

    out_flat = pl.pallas_call(
        kernel,
        out_shape=jax.ShapeDtypeStruct((N, C, HW), x.dtype),
        grid=(grid_steps,),
        in_specs=[
            pl.BlockSpec(memory_space=pltpu.SMEM),               # conv weight
            pl.BlockSpec(memory_space=pltpu.SMEM),               # conv bias
            x_spec,                                              # x (flat)
        ],
        out_specs=o_spec,
        scratch_shapes=[
            pltpu.VMEM((bn, HP, WP), jnp.float32),               # padded mean
            pltpu.VMEM((bn, HP, WP), jnp.float32),               # padded max
        ],
        compiler_params=pltpu.CompilerParams(
            dimension_semantics=("parallel",),
            vmem_limit_bytes=vmem_limit,
        ),
    )(w_flat, b, x_flat)

    return out_flat.reshape(N, C, H, W)


def _reference(x, conv_w, conv_b):
    x1 = jnp.mean(x, axis=1, keepdims=True)
    x2 = jnp.max(x, axis=1, keepdims=True)
    x3 = jnp.concatenate([x1, x2], axis=1)
    conv = jax.lax.conv_general_dilated(
        x3, conv_w, window_strides=(1, 1), padding=((PAD, PAD), (PAD, PAD)),
        dimension_numbers=("NCHW", "OIHW", "NCHW"))
    conv = conv + conv_b.reshape(1, 1, 1, 1)
    return jax.nn.sigmoid(conv) * x


if __name__ == "__main__":
    key = jax.random.PRNGKey(0)
    kx, kw, kb = jax.random.split(key, 3)

    N, C, H, W = 2, 4, 16, 16
    x = jax.random.normal(kx, (N, C, H, W), dtype=jnp.float32)

    # Deterministic "init" of the Conv2d(2, 1, kernel_size=7, padding=3) params.
    conv_w = 0.1 * jax.random.normal(kw, (1, 2, KSIZE, KSIZE), dtype=jnp.float32)
    conv_b = 0.1 * jax.random.normal(kb, (1,), dtype=jnp.float32)

    out = self_attention_block(x, conv_w, conv_b)
    out = jax.block_until_ready(out)

    ref = _reference(x, conv_w, conv_b)
    assert out.shape == (N, C, H, W)
    assert jnp.allclose(out, ref, atol=1e-5, rtol=1e-5), "mismatch vs reference"

    print("KERNEL_OK")
</pallas_src>

<mosaic_0001>
module attributes {stable_mosaic.version = 11 : i64} {
  func.func @_spatial_attn_kernel(%arg0: i32, %arg1: memref<98xf32, #tpu.memory_space<smem>>, %arg2: memref<1xf32, #tpu.memory_space<smem>>, %arg3: memref<1x4x256xf32, #tpu.memory_space<vmem>>, %arg4: memref<1x4x256xf32, #tpu.memory_space<vmem>>, %arg5: memref<1x24x128xf32, #tpu.memory_space<vmem>>, %arg6: memref<1x24x128xf32, #tpu.memory_space<vmem>>) attributes {dimension_semantics = [#tpu.dimension_semantics<parallel>], iteration_bounds = array<i64: 2>, scalar_prefetch = 0 : i64, scratch_operands = 2 : i64, tpu.core_type = #tpu.core_type<tc>, window_params = [{transform_indices = @transform_0, window_bounds = array<i64: 98>}, {transform_indices = @transform_1, window_bounds = array<i64: 1>}, {transform_indices = @transform_2, window_bounds = array<i64: 1, 4, 256>}, {transform_indices = @transform_3, window_bounds = array<i64: 1, 4, 256>}]} {
    %c0 = arith.constant 0 : index
    %0 = memref.load %arg1[%c0] : memref<98xf32, #tpu.memory_space<smem>>
    %c1 = arith.constant 1 : index
    %1 = memref.load %arg1[%c1] : memref<98xf32, #tpu.memory_space<smem>>
    %c2 = arith.constant 2 : index
    %2 = memref.load %arg1[%c2] : memref<98xf32, #tpu.memory_space<smem>>
    %c3 = arith.constant 3 : index
    %3 = memref.load %arg1[%c3] : memref<98xf32, #tpu.memory_space<smem>>
    %c4 = arith.constant 4 : index
    %4 = memref.load %arg1[%c4] : memref<98xf32, #tpu.memory_space<smem>>
    %c5 = arith.constant 5 : index
    %5 = memref.load %arg1[%c5] : memref<98xf32, #tpu.memory_space<smem>>
    %c6 = arith.constant 6 : index
    %6 = memref.load %arg1[%c6] : memref<98xf32, #tpu.memory_space<smem>>
    %c7 = arith.constant 7 : index
    %7 = memref.load %arg1[%c7] : memref<98xf32, #tpu.memory_space<smem>>
    %c8 = arith.constant 8 : index
    %8 = memref.load %arg1[%c8] : memref<98xf32, #tpu.memory_space<smem>>
    %c9 = arith.constant 9 : index
    %9 = memref.load %arg1[%c9] : memref<98xf32, #tpu.memory_space<smem>>
    %c10 = arith.constant 10 : index
    %10 = memref.load %arg1[%c10] : memref<98xf32, #tpu.memory_space<smem>>
    %c11 = arith.constant 11 : index
    %11 = memref.load %arg1[%c11] : memref<98xf32, #tpu.memory_space<smem>>
    %c12 = arith.constant 12 : index
    %12 = memref.load %arg1[%c12] : memref<98xf32, #tpu.memory_space<smem>>
    %c13 = arith.constant 13 : index
    %13 = memref.load %arg1[%c13] : memref<98xf32, #tpu.memory_space<smem>>
    %c14 = arith.constant 14 : index
    %14 = memref.load %arg1[%c14] : memref<98xf32, #tpu.memory_space<smem>>
    %c15 = arith.constant 15 : index
    %15 = memref.load %arg1[%c15] : memref<98xf32, #tpu.memory_space<smem>>
    %c16 = arith.constant 16 : index
    %16 = memref.load %arg1[%c16] : memref<98xf32, #tpu.memory_space<smem>>
    %c17 = arith.constant 17 : index
    %17 = memref.load %arg1[%c17] : memref<98xf32, #tpu.memory_space<smem>>
    %c18 = arith.constant 18 : index
    %18 = memref.load %arg1[%c18] : memref<98xf32, #tpu.memory_space<smem>>
    %c19 = arith.constant 19 : index
    %19 = memref.load %arg1[%c19] : memref<98xf32, #tpu.memory_space<smem>>
    %c20 = arith.constant 20 : index
    %20 = memref.load %arg1[%c20] : memref<98xf32, #tpu.memory_space<smem>>
    %c21 = arith.constant 21 : index
    %21 = memref.load %arg1[%c21] : memref<98xf32, #tpu.memory_space<smem>>
    %c22 = arith.constant 22 : index
    %22 = memref.load %arg1[%c22] : memref<98xf32, #tpu.memory_space<smem>>
    %c23 = arith.constant 23 : index
    %23 = memref.load %arg1[%c23] : memref<98xf32, #tpu.memory_space<smem>>
    %c24 = arith.constant 24 : index
    %24 = memref.load %arg1[%c24] : memref<98xf32, #tpu.memory_space<smem>>
    %c25 = arith.constant 25 : index
    %25 = memref.load %arg1[%c25] : memref<98xf32, #tpu.memory_space<smem>>
    %c26 = arith.constant 26 : index
    %26 = memref.load %arg1[%c26] : memref<98xf32, #tpu.memory_space<smem>>
    %c27 = arith.constant 27 : index
    %27 = memref.load %arg1[%c27] : memref<98xf32, #tpu.memory_space<smem>>
    %c28 = arith.constant 28 : index
    %28 = memref.load %arg1[%c28] : memref<98xf32, #tpu.memory_space<smem>>
    %c29 = arith.constant 29 : index
    %29 = memref.load %arg1[%c29] : memref<98xf32, #tpu.memory_space<smem>>
    %c30 = arith.constant 30 : index
    %30 = memref.load %arg1[%c30] : memref<98xf32, #tpu.memory_space<smem>>
    %c31 = arith.constant 31 : index
    %31 = memref.load %arg1[%c31] : memref<98xf32, #tpu.memory_space<smem>>
    %c32 = arith.constant 32 : index
    %32 = memref.load %arg1[%c32] : memref<98xf32, #tpu.memory_space<smem>>
    %c33 = arith.constant 33 : index
    %33 = memref.load %arg1[%c33] : memref<98xf32, #tpu.memory_space<smem>>
    %c34 = arith.constant 34 : index
    %34 = memref.load %arg1[%c34] : memref<98xf32, #tpu.memory_space<smem>>
    %c35 = arith.constant 35 : index
    %35 = memref.load %arg1[%c35] : memref<98xf32, #tpu.memory_space<smem>>
    %c36 = arith.constant 36 : index
    %36 = memref.load %arg1[%c36] : memref<98xf32, #tpu.memory_space<smem>>
    %c37 = arith.constant 37 : index
    %37 = memref.load %arg1[%c37] : memref<98xf32, #tpu.memory_space<smem>>
    %c38 = arith.constant 38 : index
    %38 = memref.load %arg1[%c38] : memref<98xf32, #tpu.memory_space<smem>>
    %c39 = arith.constant 39 : index
    %39 = memref.load %arg1[%c39] : memref<98xf32, #tpu.memory_space<smem>>
    %c40 = arith.constant 40 : index
    %40 = memref.load %arg1[%c40] : memref<98xf32, #tpu.memory_space<smem>>
    %c41 = arith.constant 41 : index
    %41 = memref.load %arg1[%c41] : memref<98xf32, #tpu.memory_space<smem>>
    %c42 = arith.constant 42 : index
    %42 = memref.load %arg1[%c42] : memref<98xf32, #tpu.memory_space<smem>>
    %c43 = arith.constant 43 : index
    %43 = memref.load %arg1[%c43] : memref<98xf32, #tpu.memory_space<smem>>
    %c44 = arith.constant 44 : index
    %44 = memref.load %arg1[%c44] : memref<98xf32, #tpu.memory_space<smem>>
    %c45 = arith.constant 45 : index
    %45 = memref.load %arg1[%c45] : memref<98xf32, #tpu.memory_space<smem>>
    %c46 = arith.constant 46 : index
    %46 = memref.load %arg1[%c46] : memref<98xf32, #tpu.memory_space<smem>>
    %c47 = arith.constant 47 : index
    %47 = memref.load %arg1[%c47] : memref<98xf32, #tpu.memory_space<smem>>
    %c48 = arith.constant 48 : index
    %48 = memref.load %arg1[%c48] : memref<98xf32, #tpu.memory_space<smem>>
    %c49 = arith.constant 49 : index
    %49 = memref.load %arg1[%c49] : memref<98xf32, #tpu.memory_space<smem>>
    %c50 = arith.constant 50 : index
    %50 = memref.load %arg1[%c50] : memref<98xf32, #tpu.memory_space<smem>>
    %c51 = arith.constant 51 : index
    %51 = memref.load %arg1[%c51] : memref<98xf32, #tpu.memory_space<smem>>
    %c52 = arith.constant 52 : index
    %52 = memref.load %arg1[%c52] : memref<98xf32, #tpu.memory_space<smem>>
    %c53 = arith.constant 53 : index
    %53 = memref.load %arg1[%c53] : memref<98xf32, #tpu.memory_space<smem>>
    %c54 = arith.constant 54 : index
    %54 = memref.load %arg1[%c54] : memref<98xf32, #tpu.memory_space<smem>>
    %c55 = arith.constant 55 : index
    %55 = memref.load %arg1[%c55] : memref<98xf32, #tpu.memory_space<smem>>
    %c56 = arith.constant 56 : index
    %56 = memref.load %arg1[%c56] : memref<98xf32, #tpu.memory_space<smem>>
    %c57 = arith.constant 57 : index
    %57 = memref.load %arg1[%c57] : memref<98xf32, #tpu.memory_space<smem>>
    %c58 = arith.constant 58 : index
    %58 = memref.load %arg1[%c58] : memref<98xf32, #tpu.memory_space<smem>>
    %c59 = arith.constant 59 : index
    %59 = memref.load %arg1[%c59] : memref<98xf32, #tpu.memory_space<smem>>
    %c60 = arith.constant 60 : index
    %60 = memref.load %arg1[%c60] : memref<98xf32, #tpu.memory_space<smem>>
    %c61 = arith.constant 61 : index
    %61 = memref.load %arg1[%c61] : memref<98xf32, #tpu.memory_space<smem>>
    %c62 = arith.constant 62 : index
    %62 = memref.load %arg1[%c62] : memref<98xf32, #tpu.memory_space<smem>>
    %c63 = arith.constant 63 : index
    %63 = memref.load %arg1[%c63] : memref<98xf32, #tpu.memory_space<smem>>
    %c64 = arith.constant 64 : index
    %64 = memref.load %arg1[%c64] : memref<98xf32, #tpu.memory_space<smem>>
    %c65 = arith.constant 65 : index
    %65 = memref.load %arg1[%c65] : memref<98xf32, #tpu.memory_space<smem>>
    %c66 = arith.constant 66 : index
    %66 = memref.load %arg1[%c66] : memref<98xf32, #tpu.memory_space<smem>>
    %c67 = arith.constant 67 : index
    %67 = memref.load %arg1[%c67] : memref<98xf32, #tpu.memory_space<smem>>
    %c68 = arith.constant 68 : index
    %68 = memref.load %arg1[%c68] : memref<98xf32, #tpu.memory_space<smem>>
    %c69 = arith.constant 69 : index
    %69 = memref.load %arg1[%c69] : memref<98xf32, #tpu.memory_space<smem>>
    %c70 = arith.constant 70 : index
    %70 = memref.load %arg1[%c70] : memref<98xf32, #tpu.memory_space<smem>>
    %c71 = arith.constant 71 : index
    %71 = memref.load %arg1[%c71] : memref<98xf32, #tpu.memory_space<smem>>
    %c72 = arith.constant 72 : index
    %72 = memref.load %arg1[%c72] : memref<98xf32, #tpu.memory_space<smem>>
    %c73 = arith.constant 73 : index
    %73 = memref.load %arg1[%c73] : memref<98xf32, #tpu.memory_space<smem>>
    %c74 = arith.constant 74 : index
    %74 = memref.load %arg1[%c74] : memref<98xf32, #tpu.memory_space<smem>>
    %c75 = arith.constant 75 : index
    %75 = memref.load %arg1[%c75] : memref<98xf32, #tpu.memory_space<smem>>
    %c76 = arith.constant 76 : index
    %76 = memref.load %arg1[%c76] : memref<98xf32, #tpu.memory_space<smem>>
    %c77 = arith.constant 77 : index
    %77 = memref.load %arg1[%c77] : memref<98xf32, #tpu.memory_space<smem>>
    %c78 = arith.constant 78 : index
    %78 = memref.load %arg1[%c78] : memref<98xf32, #tpu.memory_space<smem>>
    %c79 = arith.constant 79 : index
    %79 = memref.load %arg1[%c79] : memref<98xf32, #tpu.memory_space<smem>>
    %c80 = arith.constant 80 : index
    %80 = memref.load %arg1[%c80] : memref<98xf32, #tpu.memory_space<smem>>
    %c81 = arith.constant 81 : index
    %81 = memref.load %arg1[%c81] : memref<98xf32, #tpu.memory_space<smem>>
    %c82 = arith.constant 82 : index
    %82 = memref.load %arg1[%c82] : memref<98xf32, #tpu.memory_space<smem>>
    %c83 = arith.constant 83 : index
    %83 = memref.load %arg1[%c83] : memref<98xf32, #tpu.memory_space<smem>>
    %c84 = arith.constant 84 : index
    %84 = memref.load %arg1[%c84] : memref<98xf32, #tpu.memory_space<smem>>
    %c85 = arith.constant 85 : index
    %85 = memref.load %arg1[%c85] : memref<98xf32, #tpu.memory_space<smem>>
    %c86 = arith.constant 86 : index
    %86 = memref.load %arg1[%c86] : memref<98xf32, #tpu.memory_space<smem>>
    %c87 = arith.constant 87 : index
    %87 = memref.load %arg1[%c87] : memref<98xf32, #tpu.memory_space<smem>>
    %c88 = arith.constant 88 : index
    %88 = memref.load %arg1[%c88] : memref<98xf32, #tpu.memory_space<smem>>
    %c89 = arith.constant 89 : index
    %89 = memref.load %arg1[%c89] : memref<98xf32, #tpu.memory_space<smem>>
    %c90 = arith.constant 90 : index
    %90 = memref.load %arg1[%c90] : memref<98xf32, #tpu.memory_space<smem>>
    %c91 = arith.constant 91 : index
    %91 = memref.load %arg1[%c91] : memref<98xf32, #tpu.memory_space<smem>>
    %c92 = arith.constant 92 : index
    %92 = memref.load %arg1[%c92] : memref<98xf32, #tpu.memory_space<smem>>
    %c93 = arith.constant 93 : index
    %93 = memref.load %arg1[%c93] : memref<98xf32, #tpu.memory_space<smem>>
    %c94 = arith.constant 94 : index
    %94 = memref.load %arg1[%c94] : memref<98xf32, #tpu.memory_space<smem>>
    %c95 = arith.constant 95 : index
    %95 = memref.load %arg1[%c95] : memref<98xf32, #tpu.memory_space<smem>>
    %c96 = arith.constant 96 : index
    %96 = memref.load %arg1[%c96] : memref<98xf32, #tpu.memory_space<smem>>
    %c97 = arith.constant 97 : index
    %97 = memref.load %arg1[%c97] : memref<98xf32, #tpu.memory_space<smem>>
    %c0_0 = arith.constant 0 : index
    %98 = memref.load %arg2[%c0_0] : memref<1xf32, #tpu.memory_space<smem>>
    %c0_1 = arith.constant 0 : index
    %c0_2 = arith.constant 0 : index
    %c0_3 = arith.constant 0 : index
    %99 = vector.load %arg3[%c0_1, %c0_2, %c0_3] : memref<1x4x256xf32, #tpu.memory_space<vmem>>, vector<1x4x256xf32>
    %cst = arith.constant dense<0.000000e+00> : vector<1x256xf32>
    %100 = vector.multi_reduction <add>, %99, %cst [1] : vector<1x4x256xf32> to vector<1x256xf32>
    %cst_4 = arith.constant dense<0xFF800000> : vector<1x256xf32>
    %101 = vector.multi_reduction <maximumf>, %99, %cst_4 [1] : vector<1x4x256xf32> to vector<1x256xf32>
    %cst_5 = arith.constant 2.500000e-01 : f32
    %102 = vector.broadcast %cst_5 : f32 to vector<1x256xf32>
    %103 = arith.mulf %100, %102 : vector<1x256xf32>
    %104 = vector.shape_cast %103 : vector<1x256xf32> to vector<1x16x16xf32>
    %105 = vector.shape_cast %101 : vector<1x256xf32> to vector<1x16x16xf32>
    %cst_6 = arith.constant 0.000000e+00 : f32
    %106 = vector.broadcast %cst_6 : f32 to vector<1x3x128xf32>
    %c0_7 = arith.constant 0 : index
    %c0_8 = arith.constant 0 : index
    %c0_9 = arith.constant 0 : index
    %107 = vector.load %arg5[%c0_7, %c0_8, %c0_9] : memref<1x24x128xf32, #tpu.memory_space<vmem>>, vector<1x3x128xf32>
    tpu.vector_store %arg5[%c0_7, %c0_8, %c0_9], %106 {strides = array<i32>} : memref<1x24x128xf32, #tpu.memory_space<vmem>>, vector<1x3x128xf32>,
    %c0_10 = arith.constant 0 : index
    %c0_11 = arith.constant 0 : index
    %c0_12 = arith.constant 0 : index
    %108 = vector.load %arg6[%c0_10, %c0_11, %c0_12] : memref<1x24x128xf32, #tpu.memory_space<vmem>>, vector<1x3x128xf32>
    tpu.vector_store %arg6[%c0_10, %c0_11, %c0_12], %106 {strides = array<i32>} : memref<1x24x128xf32, #tpu.memory_space<vmem>>, vector<1x3x128xf32>,
    %cst_13 = arith.constant 0.000000e+00 : f32
    %109 = vector.broadcast %cst_13 : f32 to vector<1x5x128xf32>
    %c0_14 = arith.constant 0 : index
    %c19_15 = arith.constant 19 : index
    %c0_16 = arith.constant 0 : index
    %110 = vector.load %arg5[%c0_14, %c19_15, %c0_16] : memref<1x24x128xf32, #tpu.memory_space<vmem>>, vector<1x5x128xf32>
    tpu.vector_store %arg5[%c0_14, %c19_15, %c0_16], %109 {strides = array<i32>} : memref<1x24x128xf32, #tpu.memory_space<vmem>>, vector<1x5x128xf32>,
    %c0_17 = arith.constant 0 : index
    %c19_18 = arith.constant 19 : index
    %c0_19 = arith.constant 0 : index
    %111 = vector.load %arg6[%c0_17, %c19_18, %c0_19] : memref<1x24x128xf32, #tpu.memory_space<vmem>>, vector<1x5x128xf32>
    tpu.vector_store %arg6[%c0_17, %c19_18, %c0_19], %109 {strides = array<i32>} : memref<1x24x128xf32, #tpu.memory_space<vmem>>, vector<1x5x128xf32>,
    %cst_20 = arith.constant 0.000000e+00 : f32
    %112 = vector.broadcast %cst_20 : f32 to vector<1x16x112xf32>
    %c0_21 = arith.constant 0 : index
    %c3_22 = arith.constant 3 : index
    %c16_23 = arith.constant 16 : index
    %113 = vector.load %arg5[%c0_21, %c3_22, %c16_23] : memref<1x24x128xf32, #tpu.memory_space<vmem>>, vector<1x16x112xf32>
    tpu.vector_store %arg5[%c0_21, %c3_22, %c16_23], %112 {strides = array<i32>} : memref<1x24x128xf32, #tpu.memory_space<vmem>>, vector<1x16x112xf32>,
    %c0_24 = arith.constant 0 : index
    %c3_25 = arith.constant 3 : index
    %c16_26 = arith.constant 16 : index
    %114 = vector.load %arg6[%c0_24, %c3_25, %c16_26] : memref<1x24x128xf32, #tpu.memory_space<vmem>>, vector<1x16x112xf32>
    tpu.vector_store %arg6[%c0_24, %c3_25, %c16_26], %112 {strides = array<i32>} : memref<1x24x128xf32, #tpu.memory_space<vmem>>, vector<1x16x112xf32>,
    %c0_27 = arith.constant 0 : index
    %c3_28 = arith.constant 3 : index
    %c0_29 = arith.constant 0 : index
    %115 = vector.load %arg5[%c0_27, %c3_28, %c0_29] : memref<1x24x128xf32, #tpu.memory_space<vmem>>, vector<1x16x16xf32>
    tpu.vector_store %arg5[%c0_27, %c3_28, %c0_29], %104 {strides = array<i32>} : memref<1x24x128xf32, #tpu.memory_space<vmem>>, vector<1x16x16xf32>,
    %c0_30 = arith.constant 0 : index
    %c3_31 = arith.constant 3 : index
    %c0_32 = arith.constant 0 : index
    %116 = vector.load %arg6[%c0_30, %c3_31, %c0_32] : memref<1x24x128xf32, #tpu.memory_space<vmem>>, vector<1x16x16xf32>
    tpu.vector_store %arg6[%c0_30, %c3_31, %c0_32], %105 {strides = array<i32>} : memref<1x24x128xf32, #tpu.memory_space<vmem>>, vector<1x16x16xf32>,
    %c0_33 = arith.constant 0 : index
    %c0_34 = arith.constant 0 : index
    %c0_35 = arith.constant 0 : index
    %117 = vector.load %arg5[%c0_33, %c0_34, %c0_35] : memref<1x24x128xf32, #tpu.memory_space<vmem>>, vector<1x22x128xf32>
    %c0_36 = arith.constant 0 : index
    %c0_37 = arith.constant 0 : index
    %c0_38 = arith.constant 0 : index
    %118 = vector.load %arg6[%c0_36, %c0_37, %c0_38] : memref<1x24x128xf32, #tpu.memory_space<vmem>>, vector<1x22x128xf32>
    %cst_39 = arith.constant 0.000000e+00 : f32
    %119 = vector.broadcast %cst_39 : f32 to vector<1x16x128xf32>
    %cst_40 = arith.constant 0.000000e+00 : f32
    %120 = vector.broadcast %cst_40 : f32 to vector<1x16x128xf32>
    %c3_i32 = arith.constant 3 : i32
    %121 = tpu.dynamic_rotate %117 by %c3_i32 dim 2 : vector<1x22x128xf32>, i32 -> vector<1x22x128xf32>
    %c3_i32_41 = arith.constant 3 : i32
    %122 = tpu.dynamic_rotate %118 by %c3_i32_41 dim 2 : vector<1x22x128xf32>, i32 -> vector<1x22x128xf32>
    %123 = vector.extract_strided_slice %121 {offsets = [0, 0, 0], sizes = [1, 16, 128], strides = [1, 1, 1]} : vector<1x22x128xf32> to vector<1x16x128xf32>
    %124 = vector.broadcast %0 : f32 to vector<1x16x128xf32>
    %125 = arith.mulf %124, %123 : vector<1x16x128xf32>
    %126 = arith.addf %119, %125 : vector<1x16x128xf32>
    %127 = vector.extract_strided_slice %122 {offsets = [0, 0, 0], sizes = [1, 16, 128], strides = [1, 1, 1]} : vector<1x22x128xf32> to vector<1x16x128xf32>
    %128 = vector.broadcast %49 : f32 to vector<1x16x128xf32>
    %129 = arith.mulf %128, %127 : vector<1x16x128xf32>
    %130 = arith.addf %120, %129 : vector<1x16x128xf32>
    %131 = vector.extract_strided_slice %121 {offsets = [0, 1, 0], sizes = [1, 16, 128], strides = [1, 1, 1]} : vector<1x22x128xf32> to vector<1x16x128xf32>
    %132 = vector.broadcast %7 : f32 to vector<1x16x128xf32>
    %133 = arith.mulf %132, %131 : vector<1x16x128xf32>
    %134 = arith.addf %126, %133 : vector<1x16x128xf32>
    %135 = vector.extract_strided_slice %122 {offsets = [0, 1, 0], sizes = [1, 16, 128], strides = [1, 1, 1]} : vector<1x22x128xf32> to vector<1x16x128xf32>
    %136 = vector.broadcast %56 : f32 to vector<1x16x128xf32>
    %137 = arith.mulf %136, %135 : vector<1x16x128xf32>
    %138 = arith.addf %130, %137 : vector<1x16x128xf32>
    %139 = vector.extract_strided_slice %121 {offsets = [0, 2, 0], sizes = [1, 16, 128], strides = [1, 1, 1]} : vector<1x22x128xf32> to vector<1x16x128xf32>
    %140 = vector.broadcast %14 : f32 to vector<1x16x128xf32>
    %141 = arith.mulf %140, %139 : vector<1x16x128xf32>
    %142 = arith.addf %134, %141 : vector<1x16x128xf32>
    %143 = vector.extract_strided_slice %122 {offsets = [0, 2, 0], sizes = [1, 16, 128], strides = [1, 1, 1]} : vector<1x22x128xf32> to vector<1x16x128xf32>
    %144 = vector.broadcast %63 : f32 to vector<1x16x128xf32>
    %145 = arith.mulf %144, %143 : vector<1x16x128xf32>
    %146 = arith.addf %138, %145 : vector<1x16x128xf32>
    %147 = vector.extract_strided_slice %121 {offsets = [0, 3, 0], sizes = [1, 16, 128], strides = [1, 1, 1]} : vector<1x22x128xf32> to vector<1x16x128xf32>
    %148 = vector.broadcast %21 : f32 to vector<1x16x128xf32>
    %149 = arith.mulf %148, %147 : vector<1x16x128xf32>
    %150 = arith.addf %142, %149 : vector<1x16x128xf32>
    %151 = vector.extract_strided_slice %122 {offsets = [0, 3, 0], sizes = [1, 16, 128], strides = [1, 1, 1]} : vector<1x22x128xf32> to vector<1x16x128xf32>
    %152 = vector.broadcast %70 : f32 to vector<1x16x128xf32>
    %153 = arith.mulf %152, %151 : vector<1x16x128xf32>
    %154 = arith.addf %146, %153 : vector<1x16x128xf32>
    %155 = vector.extract_strided_slice %121 {offsets = [0, 4, 0], sizes = [1, 16, 128], strides = [1, 1, 1]} : vector<1x22x128xf32> to vector<1x16x128xf32>
    %156 = vector.broadcast %28 : f32 to vector<1x16x128xf32>
    %157 = arith.mulf %156, %155 : vector<1x16x128xf32>
    %158 = arith.addf %150, %157 : vector<1x16x128xf32>
    %159 = vector.extract_strided_slice %122 {offsets = [0, 4, 0], sizes = [1, 16, 128], strides = [1, 1, 1]} : vector<1x22x128xf32> to vector<1x16x128xf32>
    %160 = vector.broadcast %77 : f32 to vector<1x16x128xf32>
    %161 = arith.mulf %160, %159 : vector<1x16x128xf32>
    %162 = arith.addf %154, %161 : vector<1x16x128xf32>
    %163 = vector.extract_strided_slice %121 {offsets = [0, 5, 0], sizes = [1, 16, 128], strides = [1, 1, 1]} : vector<1x22x128xf32> to vector<1x16x128xf32>
    %164 = vector.broadcast %35 : f32 to vector<1x16x128xf32>
    %165 = arith.mulf %164, %163 : vector<1x16x128xf32>
    %166 = arith.addf %158, %165 : vector<1x16x128xf32>
    %167 = vector.extract_strided_slice %122 {offsets = [0, 5, 0], sizes = [1, 16, 128], strides = [1, 1, 1]} : vector<1x22x128xf32> to vector<1x16x128xf32>
    %168 = vector.broadcast %84 : f32 to vector<1x16x128xf32>
    %169 = arith.mulf %168, %167 : vector<1x16x128xf32>
    %170 = arith.addf %162, %169 : vector<1x16x128xf32>
    %171 = vector.extract_strided_slice %121 {offsets = [0, 6, 0], sizes = [1, 16, 128], strides = [1, 1, 1]} : vector<1x22x128xf32> to vector<1x16x128xf32>
    %172 = vector.broadcast %42 : f32 to vector<1x16x128xf32>
    %173 = arith.mulf %172, %171 : vector<1x16x128xf32>
    %174 = arith.addf %166, %173 : vector<1x16x128xf32>
    %175 = vector.extract_strided_slice %122 {offsets = [0, 6, 0], sizes = [1, 16, 128], strides = [1, 1, 1]} : vector<1x22x128xf32> to vector<1x16x128xf32>
    %176 = vector.broadcast %91 : f32 to vector<1x16x128xf32>
    %177 = arith.mulf %176, %175 : vector<1x16x128xf32>
    %178 = arith.addf %170, %177 : vector<1x16x128xf32>
    %c2_i32 = arith.constant 2 : i32
    %179 = tpu.dynamic_rotate %117 by %c2_i32 dim 2 : vector<1x22x128xf32>, i32 -> vector<1x22x128xf32>
    %c2_i32_42 = arith.constant 2 : i32
    %180 = tpu.dynamic_rotate %118 by %c2_i32_42 dim 2 : vector<1x22x128xf32>, i32 -> vector<1x22x128xf32>
    %181 = vector.extract_strided_slice %179 {offsets = [0, 0, 0], sizes = [1, 16, 128], strides = [1, 1, 1]} : vector<1x22x128xf32> to vector<1x16x128xf32>
    %182 = vector.broadcast %1 : f32 to vector<1x16x128xf32>
    %183 = arith.mulf %182, %181 : vector<1x16x128xf32>
    %184 = arith.addf %174, %183 : vector<1x16x128xf32>
    %185 = vector.extract_strided_slice %180 {offsets = [0, 0, 0], sizes = [1, 16, 128], strides = [1, 1, 1]} : vector<1x22x128xf32> to vector<1x16x128xf32>
    %186 = vector.broadcast %50 : f32 to vector<1x16x128xf32>
    %187 = arith.mulf %186, %185 : vector<1x16x128xf32>
    %188 = arith.addf %178, %187 : vector<1x16x128xf32>
    %189 = vector.extract_strided_slice %179 {offsets = [0, 1, 0], sizes = [1, 16, 128], strides = [1, 1, 1]} : vector<1x22x128xf32> to vector<1x16x128xf32>
    %190 = vector.broadcast %8 : f32 to vector<1x16x128xf32>
    %191 = arith.mulf %190, %189 : vector<1x16x128xf32>
    %192 = arith.addf %184, %191 : vector<1x16x128xf32>
    %193 = vector.extract_strided_slice %180 {offsets = [0, 1, 0], sizes = [1, 16, 128], strides = [1, 1, 1]} : vector<1x22x128xf32> to vector<1x16x128xf32>
    %194 = vector.broadcast %57 : f32 to vector<1x16x128xf32>
    %195 = arith.mulf %194, %193 : vector<1x16x128xf32>
    %196 = arith.addf %188, %195 : vector<1x16x128xf32>
    %197 = vector.extract_strided_slice %179 {offsets = [0, 2, 0], sizes = [1, 16, 128], strides = [1, 1, 1]} : vector<1x22x128xf32> to vector<1x16x128xf32>
    %198 = vector.broadcast %15 : f32 to vector<1x16x128xf32>
    %199 = arith.mulf %198, %197 : vector<1x16x128xf32>
    %200 = arith.addf %192, %199 : vector<1x16x128xf32>
    %201 = vector.extract_strided_slice %180 {offsets = [0, 2, 0], sizes = [1, 16, 128], strides = [1, 1, 1]} : vector<1x22x128xf32> to vector<1x16x128xf32>
    %202 = vector.broadcast %64 : f32 to vector<1x16x128xf32>
    %203 = arith.mulf %202, %201 : vector<1x16x128xf32>
    %204 = arith.addf %196, %203 : vector<1x16x128xf32>
    %205 = vector.extract_strided_slice %179 {offsets = [0, 3, 0], sizes = [1, 16, 128], strides = [1, 1, 1]} : vector<1x22x128xf32> to vector<1x16x128xf32>
    %206 = vector.broadcast %22 : f32 to vector<1x16x128xf32>
    %207 = arith.mulf %206, %205 : vector<1x16x128xf32>
    %208 = arith.addf %200, %207 : vector<1x16x128xf32>
    %209 = vector.extract_strided_slice %180 {offsets = [0, 3, 0], sizes = [1, 16, 128], strides = [1, 1, 1]} : vector<1x22x128xf32> to vector<1x16x128xf32>
    %210 = vector.broadcast %71 : f32 to vector<1x16x128xf32>
    %211 = arith.mulf %210, %209 : vector<1x16x128xf32>
    %212 = arith.addf %204, %211 : vector<1x16x128xf32>
    %213 = vector.extract_strided_slice %179 {offsets = [0, 4, 0], sizes = [1, 16, 128], strides = [1, 1, 1]} : vector<1x22x128xf32> to vector<1x16x128xf32>
    %214 = vector.broadcast %29 : f32 to vector<1x16x128xf32>
    %215 = arith.mulf %214, %213 : vector<1x16x128xf32>
    %216 = arith.addf %208, %215 : vector<1x16x128xf32>
    %217 = vector.extract_strided_slice %180 {offsets = [0, 4, 0], sizes = [1, 16, 128], strides = [1, 1, 1]} : vector<1x22x128xf32> to vector<1x16x128xf32>
    %218 = vector.broadcast %78 : f32 to vector<1x16x128xf32>
    %219 = arith.mulf %218, %217 : vector<1x16x128xf32>
    %220 = arith.addf %212, %219 : vector<1x16x128xf32>
    %221 = vector.extract_strided_slice %179 {offsets = [0, 5, 0], sizes = [1, 16, 128], strides = [1, 1, 1]} : vector<1x22x128xf32> to vector<1x16x128xf32>
    %222 = vector.broadcast %36 : f32 to vector<1x16x128xf32>
    %223 = arith.mulf %222, %221 : vector<1x16x128xf32>
    %224 = arith.addf %216, %223 : vector<1x16x128xf32>
    %225 = vector.extract_strided_slice %180 {offsets = [0, 5, 0], sizes = [1, 16, 128], strides = [1, 1, 1]} : vector<1x22x128xf32> to vector<1x16x128xf32>
    %226 = vector.broadcast %85 : f32 to vector<1x16x128xf32>
    %227 = arith.mulf %226, %225 : vector<1x16x128xf32>
    %228 = arith.addf %220, %227 : vector<1x16x128xf32>
    %229 = vector.extract_strided_slice %179 {offsets = [0, 6, 0], sizes = [1, 16, 128], strides = [1, 1, 1]} : vector<1x22x128xf32> to vector<1x16x128xf32>
    %230 = vector.broadcast %43 : f32 to vector<1x16x128xf32>
    %231 = arith.mulf %230, %229 : vector<1x16x128xf32>
    %232 = arith.addf %224, %231 : vector<1x16x128xf32>
    %233 = vector.extract_strided_slice %180 {offsets = [0, 6, 0], sizes = [1, 16, 128], strides = [1, 1, 1]} : vector<1x22x128xf32> to vector<1x16x128xf32>
    %234 = vector.broadcast %92 : f32 to vector<1x16x128xf32>
    %235 = arith.mulf %234, %233 : vector<1x16x128xf32>
    %236 = arith.addf %228, %235 : vector<1x16x128xf32>
    %c1_i32 = arith.constant 1 : i32
    %237 = tpu.dynamic_rotate %117 by %c1_i32 dim 2 : vector<1x22x128xf32>, i32 -> vector<1x22x128xf32>
    %c1_i32_43 = arith.constant 1 : i32
    %238 = tpu.dynamic_rotate %118 by %c1_i32_43 dim 2 : vector<1x22x128xf32>, i32 -> vector<1x22x128xf32>
    %239 = vector.extract_strided_slice %237 {offsets = [0, 0, 0], sizes = [1, 16, 128], strides = [1, 1, 1]} : vector<1x22x128xf32> to vector<1x16x128xf32>
    %240 = vector.broadcast %2 : f32 to vector<1x16x128xf32>
    %241 = arith.mulf %240, %239 : vector<1x16x128xf32>
    %242 = arith.addf %232, %241 : vector<1x16x128xf32>
    %243 = vector.extract_strided_slice %238 {offsets = [0, 0, 0], sizes = [1, 16, 128], strides = [1, 1, 1]} : vector<1x22x128xf32> to vector<1x16x128xf32>
    %244 = vector.broadcast %51 : f32 to vector<1x16x128xf32>
    %245 = arith.mulf %244, %243 : vector<1x16x128xf32>
    %246 = arith.addf %236, %245 : vector<1x16x128xf32>
    %247 = vector.extract_strided_slice %237 {offsets = [0, 1, 0], sizes = [1, 16, 128], strides = [1, 1, 1]} : vector<1x22x128xf32> to vector<1x16x128xf32>
    %248 = vector.broadcast %9 : f32 to vector<1x16x128xf32>
    %249 = arith.mulf %248, %247 : vector<1x16x128xf32>
    %250 = arith.addf %242, %249 : vector<1x16x128xf32>
    %251 = vector.extract_strided_slice %238 {offsets = [0, 1, 0], sizes = [1, 16, 128], strides = [1, 1, 1]} : vector<1x22x128xf32> to vector<1x16x128xf32>
    %252 = vector.broadcast %58 : f32 to vector<1x16x128xf32>
    %253 = arith.mulf %252, %251 : vector<1x16x128xf32>
    %254 = arith.addf %246, %253 : vector<1x16x128xf32>
    %255 = vector.extract_strided_slice %237 {offsets = [0, 2, 0], sizes = [1, 16, 128], strides = [1, 1, 1]} : vector<1x22x128xf32> to vector<1x16x128xf32>
    %256 = vector.broadcast %16 : f32 to vector<1x16x128xf32>
    %257 = arith.mulf %256, %255 : vector<1x16x128xf32>
    %258 = arith.addf %250, %257 : vector<1x16x128xf32>
    %259 = vector.extract_strided_slice %238 {offsets = [0, 2, 0], sizes = [1, 16, 128], strides = [1, 1, 1]} : vector<1x22x128xf32> to vector<1x16x128xf32>
    %260 = vector.broadcast %65 : f32 to vector<1x16x128xf32>
    %261 = arith.mulf %260, %259 : vector<1x16x128xf32>
    %262 = arith.addf %254, %261 : vector<1x16x128xf32>
    %263 = vector.extract_strided_slice %237 {offsets = [0, 3, 0], sizes = [1, 16, 128], strides = [1, 1, 1]} : vector<1x22x128xf32> to vector<1x16x128xf32>
    %264 = vector.broadcast %23 : f32 to vector<1x16x128xf32>
    %265 = arith.mulf %264, %263 : vector<1x16x128xf32>
    %266 = arith.addf %258, %265 : vector<1x16x128xf32>
    %267 = vector.extract_strided_slice %238 {offsets = [0, 3, 0], sizes = [1, 16, 128], strides = [1, 1, 1]} : vector<1x22x128xf32> to vector<1x16x128xf32>
    %268 = vector.broadcast %72 : f32 to vector<1x16x128xf32>
    %269 = arith.mulf %268, %267 : vector<1x16x128xf32>
    %270 = arith.addf %262, %269 : vector<1x16x128xf32>
    %271 = vector.extract_strided_slice %237 {offsets = [0, 4, 0], sizes = [1, 16, 128], strides = [1, 1, 1]} : vector<1x22x128xf32> to vector<1x16x128xf32>
    %272 = vector.broadcast %30 : f32 to vector<1x16x128xf32>
    %273 = arith.mulf %272, %271 : vector<1x16x128xf32>
    %274 = arith.addf %266, %273 : vector<1x16x128xf32>
    %275 = vector.extract_strided_slice %238 {offsets = [0, 4, 0], sizes = [1, 16, 128], strides = [1, 1, 1]} : vector<1x22x128xf32> to vector<1x16x128xf32>
    %276 = vector.broadcast %79 : f32 to vector<1x16x128xf32>
    %277 = arith.mulf %276, %275 : vector<1x16x128xf32>
    %278 = arith.addf %270, %277 : vector<1x16x128xf32>
    %279 = vector.extract_strided_slice %237 {offsets = [0, 5, 0], sizes = [1, 16, 128], strides = [1, 1, 1]} : vector<1x22x128xf32> to vector<1x16x128xf32>
    %280 = vector.broadcast %37 : f32 to vector<1x16x128xf32>
    %281 = arith.mulf %280, %279 : vector<1x16x128xf32>
    %282 = arith.addf %274, %281 : vector<1x16x128xf32>
    %283 = vector.extract_strided_slice %238 {offsets = [0, 5, 0], sizes = [1, 16, 128], strides = [1, 1, 1]} : vector<1x22x128xf32> to vector<1x16x128xf32>
    %284 = vector.broadcast %86 : f32 to vector<1x16x128xf32>
    %285 = arith.mulf %284, %283 : vector<1x16x128xf32>
    %286 = arith.addf %278, %285 : vector<1x16x128xf32>
    %287 = vector.extract_strided_slice %237 {offsets = [0, 6, 0], sizes = [1, 16, 128], strides = [1, 1, 1]} : vector<1x22x128xf32> to vector<1x16x128xf32>
    %288 = vector.broadcast %44 : f32 to vector<1x16x128xf32>
    %289 = arith.mulf %288, %287 : vector<1x16x128xf32>
    %290 = arith.addf %282, %289 : vector<1x16x128xf32>
    %291 = vector.extract_strided_slice %238 {offsets = [0, 6, 0], sizes = [1, 16, 128], strides = [1, 1, 1]} : vector<1x22x128xf32> to vector<1x16x128xf32>
    %292 = vector.broadcast %93 : f32 to vector<1x16x128xf32>
    %293 = arith.mulf %292, %291 : vector<1x16x128xf32>
    %294 = arith.addf %286, %293 : vector<1x16x128xf32>
    %295 = vector.extract_strided_slice %117 {offsets = [0, 0, 0], sizes = [1, 16, 128], strides = [1, 1, 1]} : vector<1x22x128xf32> to vector<1x16x128xf32>
    %296 = vector.broadcast %3 : f32 to vector<1x16x128xf32>
    %297 = arith.mulf %296, %295 : vector<1x16x128xf32>
    %298 = arith.addf %290, %297 : vector<1x16x128xf32>
    %299 = vector.extract_strided_slice %118 {offsets = [0, 0, 0], sizes = [1, 16, 128], strides = [1, 1, 1]} : vector<1x22x128xf32> to vector<1x16x128xf32>
    %300 = vector.broadcast %52 : f32 to vector<1x16x128xf32>
    %301 = arith.mulf %300, %299 : vector<1x16x128xf32>
    %302 = arith.addf %294, %301 : vector<1x16x128xf32>
    %303 = vector.extract_strided_slice %117 {offsets = [0, 1, 0], sizes = [1, 16, 128], strides = [1, 1, 1]} : vector<1x22x128xf32> to vector<1x16x128xf32>
    %304 = vector.broadcast %10 : f32 to vector<1x16x128xf32>
    %305 = arith.mulf %304, %303 : vector<1x16x128xf32>
    %306 = arith.addf %298, %305 : vector<1x16x128xf32>
    %307 = vector.extract_strided_slice %118 {offsets = [0, 1, 0], sizes = [1, 16, 128], strides = [1, 1, 1]} : vector<1x22x128xf32> to vector<1x16x128xf32>
    %308 = vector.broadcast %59 : f32 to vector<1x16x128xf32>
    %309 = arith.mulf %308, %307 : vector<1x16x128xf32>
    %310 = arith.addf %302, %309 : vector<1x16x128xf32>
    %311 = vector.extract_strided_slice %117 {offsets = [0, 2, 0], sizes = [1, 16, 128], strides = [1, 1, 1]} : vector<1x22x128xf32> to vector<1x16x128xf32>
    %312 = vector.broadcast %17 : f32 to vector<1x16x128xf32>
    %313 = arith.mulf %312, %311 : vector<1x16x128xf32>
    %314 = arith.addf %306, %313 : vector<1x16x128xf32>
    %315 = vector.extract_strided_slice %118 {offsets = [0, 2, 0], sizes = [1, 16, 128], strides = [1, 1, 1]} : vector<1x22x128xf32> to vector<1x16x128xf32>
    %316 = vector.broadcast %66 : f32 to vector<1x16x128xf32>
    %317 = arith.mulf %316, %315 : vector<1x16x128xf32>
    %318 = arith.addf %310, %317 : vector<1x16x128xf32>
    %319 = vector.extract_strided_slice %117 {offsets = [0, 3, 0], sizes = [1, 16, 128], strides = [1, 1, 1]} : vector<1x22x128xf32> to vector<1x16x128xf32>
    %320 = vector.broadcast %24 : f32 to vector<1x16x128xf32>
    %321 = arith.mulf %320, %319 : vector<1x16x128xf32>
    %322 = arith.addf %314, %321 : vector<1x16x128xf32>
    %323 = vector.extract_strided_slice %118 {offsets = [0, 3, 0], sizes = [1, 16, 128], strides = [1, 1, 1]} : vector<1x22x128xf32> to vector<1x16x128xf32>
    %324 = vector.broadcast %73 : f32 to vector<1x16x128xf32>
    %325 = arith.mulf %324, %323 : vector<1x16x128xf32>
    %326 = arith.addf %318, %325 : vector<1x16x128xf32>
    %327 = vector.extract_strided_slice %117 {offsets = [0, 4, 0], sizes = [1, 16, 128], strides = [1, 1, 1]} : vector<1x22x128xf32> to vector<1x16x128xf32>
    %328 = vector.broadcast %31 : f32 to vector<1x16x128xf32>
    %329 = arith.mulf %328, %327 : vector<1x16x128xf32>
    %330 = arith.addf %322, %329 : vector<1x16x128xf32>
    %331 = vector.extract_strided_slice %118 {offsets = [0, 4, 0], sizes = [1, 16, 128], strides = [1, 1, 1]} : vector<1x22x128xf32> to vector<1x16x128xf32>
    %332 = vector.broadcast %80 : f32 to vector<1x16x128xf32>
    %333 = arith.mulf %332, %331 : vector<1x16x128xf32>
    %334 = arith.addf %326, %333 : vector<1x16x128xf32>
    %335 = vector.extract_strided_slice %117 {offsets = [0, 5, 0], sizes = [1, 16, 128], strides = [1, 1, 1]} : vector<1x22x128xf32> to vector<1x16x128xf32>
    %336 = vector.broadcast %38 : f32 to vector<1x16x128xf32>
    %337 = arith.mulf %336, %335 : vector<1x16x128xf32>
    %338 = arith.addf %330, %337 : vector<1x16x128xf32>
    %339 = vector.extract_strided_slice %118 {offsets = [0, 5, 0], sizes = [1, 16, 128], strides = [1, 1, 1]} : vector<1x22x128xf32> to vector<1x16x128xf32>
    %340 = vector.broadcast %87 : f32 to vector<1x16x128xf32>
    %341 = arith.mulf %340, %339 : vector<1x16x128xf32>
    %342 = arith.addf %334, %341 : vector<1x16x128xf32>
    %343 = vector.extract_strided_slice %117 {offsets = [0, 6, 0], sizes = [1, 16, 128], strides = [1, 1, 1]} : vector<1x22x128xf32> to vector<1x16x128xf32>
    %344 = vector.broadcast %45 : f32 to vector<1x16x128xf32>
    %345 = arith.mulf %344, %343 : vector<1x16x128xf32>
    %346 = arith.addf %338, %345 : vector<1x16x128xf32>
    %347 = vector.extract_strided_slice %118 {offsets = [0, 6, 0], sizes = [1, 16, 128], strides = [1, 1, 1]} : vector<1x22x128xf32> to vector<1x16x128xf32>
    %348 = vector.broadcast %94 : f32 to vector<1x16x128xf32>
    %349 = arith.mulf %348, %347 : vector<1x16x128xf32>
    %350 = arith.addf %342, %349 : vector<1x16x128xf32>
    %c127_i32 = arith.constant 127 : i32
    %351 = tpu.dynamic_rotate %117 by %c127_i32 dim 2 : vector<1x22x128xf32>, i32 -> vector<1x22x128xf32>
    %c127_i32_44 = arith.constant 127 : i32
    %352 = tpu.dynamic_rotate %118 by %c127_i32_44 dim 2 : vector<1x22x128xf32>, i32 -> vector<1x22x128xf32>
    %353 = vector.extract_strided_slice %351 {offsets = [0, 0, 0], sizes = [1, 16, 128], strides = [1, 1, 1]} : vector<1x22x128xf32> to vector<1x16x128xf32>
    %354 = vector.broadcast %4 : f32 to vector<1x16x128xf32>
    %355 = arith.mulf %354, %353 : vector<1x16x128xf32>
    %356 = arith.addf %346, %355 : vector<1x16x128xf32>
    %357 = vector.extract_strided_slice %352 {offsets = [0, 0, 0], sizes = [1, 16, 128], strides = [1, 1, 1]} : vector<1x22x128xf32> to vector<1x16x128xf32>
    %358 = vector.broadcast %53 : f32 to vector<1x16x128xf32>
    %359 = arith.mulf %358, %357 : vector<1x16x128xf32>
    %360 = arith.addf %350, %359 : vector<1x16x128xf32>
    %361 = vector.extract_strided_slice %351 {offsets = [0, 1, 0], sizes = [1, 16, 128], strides = [1, 1, 1]} : vector<1x22x128xf32> to vector<1x16x128xf32>
    %362 = vector.broadcast %11 : f32 to vector<1x16x128xf32>
    %363 = arith.mulf %362, %361 : vector<1x16x128xf32>
    %364 = arith.addf %356, %363 : vector<1x16x128xf32>
    %365 = vector.extract_strided_slice %352 {offsets = [0, 1, 0], sizes = [1, 16, 128], strides = [1, 1, 1]} : vector<1x22x128xf32> to vector<1x16x128xf32>
    %366 = vector.broadcast %60 : f32 to vector<1x16x128xf32>
    %367 = arith.mulf %366, %365 : vector<1x16x128xf32>
    %368 = arith.addf %360, %367 : vector<1x16x128xf32>
    %369 = vector.extract_strided_slice %351 {offsets = [0, 2, 0], sizes = [1, 16, 128], strides = [1, 1, 1]} : vector<1x22x128xf32> to vector<1x16x128xf32>
    %370 = vector.broadcast %18 : f32 to vector<1x16x128xf32>
    %371 = arith.mulf %370, %369 : vector<1x16x128xf32>
    %372 = arith.addf %364, %371 : vector<1x16x128xf32>
    %373 = vector.extract_strided_slice %352 {offsets = [0, 2, 0], sizes = [1, 16, 128], strides = [1, 1, 1]} : vector<1x22x128xf32> to vector<1x16x128xf32>
    %374 = vector.broadcast %67 : f32 to vector<1x16x128xf32>
    %375 = arith.mulf %374, %373 : vector<1x16x128xf32>
    %376 = arith.addf %368, %375 : vector<1x16x128xf32>
    %377 = vector.extract_strided_slice %351 {offsets = [0, 3, 0], sizes = [1, 16, 128], strides = [1, 1, 1]} : vector<1x22x128xf32> to vector<1x16x128xf32>
    %378 = vector.broadcast %25 : f32 to vector<1x16x128xf32>
    %379 = arith.mulf %378, %377 : vector<1x16x128xf32>
    %380 = arith.addf %372, %379 : vector<1x16x128xf32>
    %381 = vector.extract_strided_slice %352 {offsets = [0, 3, 0], sizes = [1, 16, 128], strides = [1, 1, 1]} : vector<1x22x128xf32> to vector<1x16x128xf32>
    %382 = vector.broadcast %74 : f32 to vector<1x16x128xf32>
    %383 = arith.mulf %382, %381 : vector<1x16x128xf32>
    %384 = arith.addf %376, %383 : vector<1x16x128xf32>
    %385 = vector.extract_strided_slice %351 {offsets = [0, 4, 0], sizes = [1, 16, 128], strides = [1, 1, 1]} : vector<1x22x128xf32> to vector<1x16x128xf32>
    %386 = vector.broadcast %32 : f32 to vector<1x16x128xf32>
    %387 = arith.mulf %386, %385 : vector<1x16x128xf32>
    %388 = arith.addf %380, %387 : vector<1x16x128xf32>
    %389 = vector.extract_strided_slice %352 {offsets = [0, 4, 0], sizes = [1, 16, 128], strides = [1, 1, 1]} : vector<1x22x128xf32> to vector<1x16x128xf32>
    %390 = vector.broadcast %81 : f32 to vector<1x16x128xf32>
    %391 = arith.mulf %390, %389 : vector<1x16x128xf32>
    %392 = arith.addf %384, %391 : vector<1x16x128xf32>
    %393 = vector.extract_strided_slice %351 {offsets = [0, 5, 0], sizes = [1, 16, 128], strides = [1, 1, 1]} : vector<1x22x128xf32> to vector<1x16x128xf32>
    %394 = vector.broadcast %39 : f32 to vector<1x16x128xf32>
    %395 = arith.mulf %394, %393 : vector<1x16x128xf32>
    %396 = arith.addf %388, %395 : vector<1x16x128xf32>
    %397 = vector.extract_strided_slice %352 {offsets = [0, 5, 0], sizes = [1, 16, 128], strides = [1, 1, 1]} : vector<1x22x128xf32> to vector<1x16x128xf32>
    %398 = vector.broadcast %88 : f32 to vector<1x16x128xf32>
    %399 = arith.mulf %398, %397 : vector<1x16x128xf32>
    %400 = arith.addf %392, %399 : vector<1x16x128xf32>
    %401 = vector.extract_strided_slice %351 {offsets = [0, 6, 0], sizes = [1, 16, 128], strides = [1, 1, 1]} : vector<1x22x128xf32> to vector<1x16x128xf32>
    %402 = vector.broadcast %46 : f32 to vector<1x16x128xf32>
    %403 = arith.mulf %402, %401 : vector<1x16x128xf32>
    %404 = arith.addf %396, %403 : vector<1x16x128xf32>
    %405 = vector.extract_strided_slice %352 {offsets = [0, 6, 0], sizes = [1, 16, 128], strides = [1, 1, 1]} : vector<1x22x128xf32> to vector<1x16x128xf32>
    %406 = vector.broadcast %95 : f32 to vector<1x16x128xf32>
    %407 = arith.mulf %406, %405 : vector<1x16x128xf32>
    %408 = arith.addf %400, %407 : vector<1x16x128xf32>
    %c126_i32 = arith.constant 126 : i32
    %409 = tpu.dynamic_rotate %117 by %c126_i32 dim 2 : vector<1x22x128xf32>, i32 -> vector<1x22x128xf32>
    %c126_i32_45 = arith.constant 126 : i32
    %410 = tpu.dynamic_rotate %118 by %c126_i32_45 dim 2 : vector<1x22x128xf32>, i32 -> vector<1x22x128xf32>
    %411 = vector.extract_strided_slice %409 {offsets = [0, 0, 0], sizes = [1, 16, 128], strides = [1, 1, 1]} : vector<1x22x128xf32> to vector<1x16x128xf32>
    %412 = vector.broadcast %5 : f32 to vector<1x16x128xf32>
    %413 = arith.mulf %412, %411 : vector<1x16x128xf32>
    %414 = arith.addf %404, %413 : vector<1x16x128xf32>
    %415 = vector.extract_strided_slice %410 {offsets = [0, 0, 0], sizes = [1, 16, 128], strides = [1, 1, 1]} : vector<1x22x128xf32> to vector<1x16x128xf32>
    %416 = vector.broadcast %54 : f32 to vector<1x16x128xf32>
    %417 = arith.mulf %416, %415 : vector<1x16x128xf32>
    %418 = arith.addf %408, %417 : vector<1x16x128xf32>
    %419 = vector.extract_strided_slice %409 {offsets = [0, 1, 0], sizes = [1, 16, 128], strides = [1, 1, 1]} : vector<1x22x128xf32> to vector<1x16x128xf32>
    %420 = vector.broadcast %12 : f32 to vector<1x16x128xf32>
    %421 = arith.mulf %420, %419 : vector<1x16x128xf32>
    %422 = arith.addf %414, %421 : vector<1x16x128xf32>
    %423 = vector.extract_strided_slice %410 {offsets = [0, 1, 0], sizes = [1, 16, 128], strides = [1, 1, 1]} : vector<1x22x128xf32> to vector<1x16x128xf32>
    %424 = vector.broadcast %61 : f32 to vector<1x16x128xf32>
    %425 = arith.mulf %424, %423 : vector<1x16x128xf32>
    %426 = arith.addf %418, %425 : vector<1x16x128xf32>
    %427 = vector.extract_strided_slice %409 {offsets = [0, 2, 0], sizes = [1, 16, 128], strides = [1, 1, 1]} : vector<1x22x128xf32> to vector<1x16x128xf32>
    %428 = vector.broadcast %19 : f32 to vector<1x16x128xf32>
    %429 = arith.mulf %428, %427 : vector<1x16x128xf32>
    %430 = arith.addf %422, %429 : vector<1x16x128xf32>
    %431 = vector.extract_strided_slice %410 {offsets = [0, 2, 0], sizes = [1, 16, 128], strides = [1, 1, 1]} : vector<1x22x128xf32> to vector<1x16x128xf32>
    %432 = vector.broadcast %68 : f32 to vector<1x16x128xf32>
    %433 = arith.mulf %432, %431 : vector<1x16x128xf32>
    %434 = arith.addf %426, %433 : vector<1x16x128xf32>
    %435 = vector.extract_strided_slice %409 {offsets = [0, 3, 0], sizes = [1, 16, 128], strides = [1, 1, 1]} : vector<1x22x128xf32> to vector<1x16x128xf32>
    %436 = vector.broadcast %26 : f32 to vector<1x16x128xf32>
    %437 = arith.mulf %436, %435 : vector<1x16x128xf32>
    %438 = arith.addf %430, %437 : vector<1x16x128xf32>
    %439 = vector.extract_strided_slice %410 {offsets = [0, 3, 0], sizes = [1, 16, 128], strides = [1, 1, 1]} : vector<1x22x128xf32> to vector<1x16x128xf32>
    %440 = vector.broadcast %75 : f32 to vector<1x16x128xf32>
    %441 = arith.mulf %440, %439 : vector<1x16x128xf32>
    %442 = arith.addf %434, %441 : vector<1x16x128xf32>
    %443 = vector.extract_strided_slice %409 {offsets = [0, 4, 0], sizes = [1, 16, 128], strides = [1, 1, 1]} : vector<1x22x128xf32> to vector<1x16x128xf32>
    %444 = vector.broadcast %33 : f32 to vector<1x16x128xf32>
    %445 = arith.mulf %444, %443 : vector<1x16x128xf32>
    %446 = arith.addf %438, %445 : vector<1x16x128xf32>
    %447 = vector.extract_strided_slice %410 {offsets = [0, 4, 0], sizes = [1, 16, 128], strides = [1, 1, 1]} : vector<1x22x128xf32> to vector<1x16x128xf32>
    %448 = vector.broadcast %82 : f32 to vector<1x16x128xf32>
    %449 = arith.mulf %448, %447 : vector<1x16x128xf32>
    %450 = arith.addf %442, %449 : vector<1x16x128xf32>
    %451 = vector.extract_strided_slice %409 {offsets = [0, 5, 0], sizes = [1, 16, 128], strides = [1, 1, 1]} : vector<1x22x128xf32> to vector<1x16x128xf32>
    %452 = vector.broadcast %40 : f32 to vector<1x16x128xf32>
    %453 = arith.mulf %452, %451 : vector<1x16x128xf32>
    %454 = arith.addf %446, %453 : vector<1x16x128xf32>
    %455 = vector.extract_strided_slice %410 {offsets = [0, 5, 0], sizes = [1, 16, 128], strides = [1, 1, 1]} : vector<1x22x128xf32> to vector<1x16x128xf32>
    %456 = vector.broadcast %89 : f32 to vector<1x16x128xf32>
    %457 = arith.mulf %456, %455 : vector<1x16x128xf32>
    %458 = arith.addf %450, %457 : vector<1x16x128xf32>
    %459 = vector.extract_strided_slice %409 {offsets = [0, 6, 0], sizes = [1, 16, 128], strides = [1, 1, 1]} : vector<1x22x128xf32> to vector<1x16x128xf32>
    %460 = vector.broadcast %47 : f32 to vector<1x16x128xf32>
    %461 = arith.mulf %460, %459 : vector<1x16x128xf32>
    %462 = arith.addf %454, %461 : vector<1x16x128xf32>
    %463 = vector.extract_strided_slice %410 {offsets = [0, 6, 0], sizes = [1, 16, 128], strides = [1, 1, 1]} : vector<1x22x128xf32> to vector<1x16x128xf32>
    %464 = vector.broadcast %96 : f32 to vector<1x16x128xf32>
    %465 = arith.mulf %464, %463 : vector<1x16x128xf32>
    %466 = arith.addf %458, %465 : vector<1x16x128xf32>
    %c125_i32 = arith.constant 125 : i32
    %467 = tpu.dynamic_rotate %117 by %c125_i32 dim 2 : vector<1x22x128xf32>, i32 -> vector<1x22x128xf32>
    %c125_i32_46 = arith.constant 125 : i32
    %468 = tpu.dynamic_rotate %118 by %c125_i32_46 dim 2 : vector<1x22x128xf32>, i32 -> vector<1x22x128xf32>
    %469 = vector.extract_strided_slice %467 {offsets = [0, 0, 0], sizes = [1, 16, 128], strides = [1, 1, 1]} : vector<1x22x128xf32> to vector<1x16x128xf32>
    %470 = vector.broadcast %6 : f32 to vector<1x16x128xf32>
    %471 = arith.mulf %470, %469 : vector<1x16x128xf32>
    %472 = arith.addf %462, %471 : vector<1x16x128xf32>
    %473 = vector.extract_strided_slice %468 {offsets = [0, 0, 0], sizes = [1, 16, 128], strides = [1, 1, 1]} : vector<1x22x128xf32> to vector<1x16x128xf32>
    %474 = vector.broadcast %55 : f32 to vector<1x16x128xf32>
    %475 = arith.mulf %474, %473 : vector<1x16x128xf32>
    %476 = arith.addf %466, %475 : vector<1x16x128xf32>
    %477 = vector.extract_strided_slice %467 {offsets = [0, 1, 0], sizes = [1, 16, 128], strides = [1, 1, 1]} : vector<1x22x128xf32> to vector<1x16x128xf32>
    %478 = vector.broadcast %13 : f32 to vector<1x16x128xf32>
    %479 = arith.mulf %478, %477 : vector<1x16x128xf32>
    %480 = arith.addf %472, %479 : vector<1x16x128xf32>
    %481 = vector.extract_strided_slice %468 {offsets = [0, 1, 0], sizes = [1, 16, 128], strides = [1, 1, 1]} : vector<1x22x128xf32> to vector<1x16x128xf32>
    %482 = vector.broadcast %62 : f32 to vector<1x16x128xf32>
    %483 = arith.mulf %482, %481 : vector<1x16x128xf32>
    %484 = arith.addf %476, %483 : vector<1x16x128xf32>
    %485 = vector.extract_strided_slice %467 {offsets = [0, 2, 0], sizes = [1, 16, 128], strides = [1, 1, 1]} : vector<1x22x128xf32> to vector<1x16x128xf32>
    %486 = vector.broadcast %20 : f32 to vector<1x16x128xf32>
    %487 = arith.mulf %486, %485 : vector<1x16x128xf32>
    %488 = arith.addf %480, %487 : vector<1x16x128xf32>
    %489 = vector.extract_strided_slice %468 {offsets = [0, 2, 0], sizes = [1, 16, 128], strides = [1, 1, 1]} : vector<1x22x128xf32> to vector<1x16x128xf32>
    %490 = vector.broadcast %69 : f32 to vector<1x16x128xf32>
    %491 = arith.mulf %490, %489 : vector<1x16x128xf32>
    %492 = arith.addf %484, %491 : vector<1x16x128xf32>
    %493 = vector.extract_strided_slice %467 {offsets = [0, 3, 0], sizes = [1, 16, 128], strides = [1, 1, 1]} : vector<1x22x128xf32> to vector<1x16x128xf32>
    %494 = vector.broadcast %27 : f32 to vector<1x16x128xf32>
    %495 = arith.mulf %494, %493 : vector<1x16x128xf32>
    %496 = arith.addf %488, %495 : vector<1x16x128xf32>
    %497 = vector.extract_strided_slice %468 {offsets = [0, 3, 0], sizes = [1, 16, 128], strides = [1, 1, 1]} : vector<1x22x128xf32> to vector<1x16x128xf32>
    %498 = vector.broadcast %76 : f32 to vector<1x16x128xf32>
    %499 = arith.mulf %498, %497 : vector<1x16x128xf32>
    %500 = arith.addf %492, %499 : vector<1x16x128xf32>
    %501 = vector.extract_strided_slice %467 {offsets = [0, 4, 0], sizes = [1, 16, 128], strides = [1, 1, 1]} : vector<1x22x128xf32> to vector<1x16x128xf32>
    %502 = vector.broadcast %34 : f32 to vector<1x16x128xf32>
    %503 = arith.mulf %502, %501 : vector<1x16x128xf32>
    %504 = arith.addf %496, %503 : vector<1x16x128xf32>
    %505 = vector.extract_strided_slice %468 {offsets = [0, 4, 0], sizes = [1, 16, 128], strides = [1, 1, 1]} : vector<1x22x128xf32> to vector<1x16x128xf32>
    %506 = vector.broadcast %83 : f32 to vector<1x16x128xf32>
    %507 = arith.mulf %506, %505 : vector<1x16x128xf32>
    %508 = arith.addf %500, %507 : vector<1x16x128xf32>
    %509 = vector.extract_strided_slice %467 {offsets = [0, 5, 0], sizes = [1, 16, 128], strides = [1, 1, 1]} : vector<1x22x128xf32> to vector<1x16x128xf32>
    %510 = vector.broadcast %41 : f32 to vector<1x16x128xf32>
    %511 = arith.mulf %510, %509 : vector<1x16x128xf32>
    %512 = arith.addf %504, %511 : vector<1x16x128xf32>
    %513 = vector.extract_strided_slice %468 {offsets = [0, 5, 0], sizes = [1, 16, 128], strides = [1, 1, 1]} : vector<1x22x128xf32> to vector<1x16x128xf32>
    %514 = vector.broadcast %90 : f32 to vector<1x16x128xf32>
    %515 = arith.mulf %514, %513 : vector<1x16x128xf32>
    %516 = arith.addf %508, %515 : vector<1x16x128xf32>
    %517 = vector.extract_strided_slice %467 {offsets = [0, 6, 0], sizes = [1, 16, 128], strides = [1, 1, 1]} : vector<1x22x128xf32> to vector<1x16x128xf32>
    %518 = vector.broadcast %48 : f32 to vector<1x16x128xf32>
    %519 = arith.mulf %518, %517 : vector<1x16x128xf32>
    %520 = arith.addf %512, %519 : vector<1x16x128xf32>
    %521 = vector.extract_strided_slice %468 {offsets = [0, 6, 0], sizes = [1, 16, 128], strides = [1, 1, 1]} : vector<1x22x128xf32> to vector<1x16x128xf32>
    %522 = vector.broadcast %97 : f32 to vector<1x16x128xf32>
    %523 = arith.mulf %522, %521 : vector<1x16x128xf32>
    %524 = arith.addf %516, %523 : vector<1x16x128xf32>
    %525 = arith.addf %520, %524 : vector<1x16x128xf32>
    %526 = vector.broadcast %98 : f32 to vector<1x16x128xf32>
    %527 = arith.addf %525, %526 : vector<1x16x128xf32>
    %528 = vector.extract_strided_slice %527 {offsets = [0, 0, 0], sizes = [1, 16, 16], strides = [1, 1, 1]} : vector<1x16x128xf32> to vector<1x16x16xf32>
    %529 = arith.negf %528 : vector<1x16x16xf32>
    %530 = math.exp %529 : vector<1x16x16xf32>
    %cst_47 = arith.constant 1.000000e+00 : f32
    %531 = vector.broadcast %cst_47 : f32 to vector<1x16x16xf32>
    %532 = arith.addf %531, %530 : vector<1x16x16xf32>
    %533 = arith.divf %531, %532 : vector<1x16x16xf32>
    %534 = vector.shape_cast %533 : vector<1x16x16xf32> to vector<1x1x256xf32>
    %c0_48 = arith.constant 0 : index
    %c0_49 = arith.constant 0 : index
    %c0_50 = arith.constant 0 : index
    %535 = vector.load %arg3[%c0_48, %c0_49, %c0_50] : memref<1x4x256xf32, #tpu.memory_space<vmem>>, vector<1x4x256xf32>
    %536 = vector.broadcast %534 : vector<1x1x256xf32> to vector<1x4x256xf32>
    %537 = arith.mulf %536, %535 : vector<1x4x256xf32>
    %c0_51 = arith.constant 0 : index
    %c0_52 = arith.constant 0 : index
    %c0_53 = arith.constant 0 : index
    %538 = vector.load %arg4[%c0_51, %c0_52, %c0_53] : memref<1x4x256xf32, #tpu.memory_space<vmem>>, vector<1x4x256xf32>
    tpu.vector_store %arg4[%c0_51, %c0_52, %c0_53], %537 {strides = array<i32>} : memref<1x4x256xf32, #tpu.memory_space<vmem>>, vector<1x4x256xf32>,
    return
  }
  func.func @transform_0(%arg0: i32) -> i32 {
    %c0_i32 = arith.constant 0 : i32
    %c0_i32_0 = arith.constant 0 : i32
    return %c0_i32 : i32
  }
  func.func @transform_1(%arg0: i32) -> i32 {
    %c0_i32 = arith.constant 0 : i32
    %c0_i32_0 = arith.constant 0 : i32
    return %c0_i32 : i32
  }
  func.func @transform_2(%arg0: i32) -> (i32, i32, i32) {
    %c0_i32 = arith.constant 0 : i32
    %c0_i32_0 = arith.constant 0 : i32
    %c0_i32_1 = arith.constant 0 : i32
    return %arg0, %c0_i32, %c0_i32_0 : i32, i32, i32
  }
  func.func @transform_3(%arg0: i32) -> (i32, i32, i32) {
    %c0_i32 = arith.constant 0 : i32
    %c0_i32_0 = arith.constant 0 : i32
    %c0_i32_1 = arith.constant 0 : i32
    return %arg0, %c0_i32, %c0_i32_0 : i32, i32, i32
  }
}

</mosaic_0001>

<llo_original>
// kernel: tpu_custom_call.1
$region0: #{tpu_custom_call.1}
  #allocation0 [shape = 'u32[]', space=smem, size = 0x4, offset = 0x4, fixed_abs, tag = 'smem constant byte address 0x4 - core index']
  #allocation1 [shape = 'u32[144,128]{1,0:T(1,128)}', space=vmem, size = 0x12000, scoped, tag = 'internal scratch']
  #allocation2 [shape = 'f32[1,24,128]{2,1,0:T(8,128)}', space=vmem, size = 0x3000, scoped, tag = 'scratch operand']
  #allocation3 [shape = 'f32[1,24,128]{2,1,0:T(8,128)}', space=vmem, size = 0x3000, scoped, tag = 'scratch operand']
  #allocation4 [shape = 'f32[1]{0:T(128)S(6)}', space=smem, size = 0x200, scoped, tag = 'scoped memory for tpu_custom_call.1']
  %s0 = inlined_call_operand.vmem [shape: f32[98], index: 0, kind: input, shape index: {}]
  %s1 = inlined_call_operand.<no memory space> [shape: f32[1], index: 1, kind: input, shape index: {}]
  %s2 = inlined_call_operand.hbm [shape: f32[2,4,256], index: 2, kind: input, shape index: {}]
  %s3 = inlined_call_operand.hbm [shape: f32[2,4,256], index: 3, kind: output, shape index: {}]
  %s4 = sld [smem:[#allocation0]]
  $region53: #{tpu_custom_call.1} parent=0
    _
  %s6 = ssub.s32 1, %s4
  %s7 = scalar_select 0, %s6, %s4
  %8 = sst [smem:[#allocation4]] %s1
  $region1: #{tpu_custom_call.1} parent=0
    #allocation5 [shape = 'u8[512]{0}', space=smem, size = 0x200, scoped, tag = 'input window, operand 0, single buffered']
    #allocation6 [shape = 's32[2]{0}', space=sflag, size = 0x8, scoped, tag = 'scoped memory for tpu_custom_call.1']
    #allocation7 [shape = 's32[2]{0}', space=sflag, size = 0x8, scoped, tag = 'scoped memory for tpu_custom_call.1']
    #allocation8 [shape = 's32[2]{0}', space=sflag, size = 0x8, scoped, tag = 'scoped memory for tpu_custom_call.1']
    #allocation9 [shape = 'u8[8192]{0}', space=vmem, size = 0x2000, scoped, tag = 'input window, operand 2']
    #allocation10 [shape = 'u8[8192]{0}', space=vmem, size = 0x2000, scoped, tag = 'output window, operand 0']
    %9 = vsyncpa [#allocation8], 0
    %10 = vsyncpa [#allocation6], 0
    %s11 = scalar_lea.sflag [#allocation6], 1
    %12 = vsyncpa %s11, 0
    %13 = vsyncpa [#allocation7], 0
    %s14 = scalar_lea.sflag [#allocation7], 1
    %15 = vsyncpa %s14, 0
    loop: start=0, step=1, limit=4
    $region2: #{tpu_custom_call.1} parent=1 // loop_pre_header
      _
    $region3: #{tpu_custom_call.1} parent=1 // loop_header
      %s17 = sphi 0, %s21
      %p18 = scmp.ge.s32.totalorder %s17, 4
      %s25 = sphi 0, %s25
      %s27 = sphi 0, %s25
      %s28 = sphi 0, %s27
      %s42 = sphi 0, %s28
      %s46 = sphi 0, %s46
      %s48 = sphi 0, %s46
      %s49 = sphi 0, %s48
      %s63 = sphi 0, %s49
      %s69 = sphi 0, %s71
      %s72 = sphi 0, %s69
      %s73 = sphi 0, %s72
      %s89 = sphi 0, %s73
      %s95 = sphi 0, %s97
      %s98 = sphi 0, %s95
      %s99 = sphi 0, %s98
      %s115 = sphi 0, %s99
    $region4: #{tpu_custom_call.1} parent=1 // loop_header_branch
      %20 = sbr.rel (%p18) target = $region8
    $region5: #{tpu_custom_call.1} parent=1 // loop_body
      %s22 = ssub.s32 %s17, 1
      %s23 = ssub.s32 %s17, 2
      %s24 = sadd.s32 %s17, 1
      %s26 = sadd.s32 %s25, 1
      %p29 = scmp.eq.s32.totalorder %s17, 1
      %p30 = scmp.ne.s32.totalorder %s25, %s27
      %p31 = scmp.eq.s32.totalorder %s17, 0
      %p32 = por %p30, %p31
      %p33 = scmp.ne.s32.totalorder %s25, %s27
      %p34 = scmp.eq.s32.totalorder %s22, 1
      %p35 = por %p33, %p34
      %p36 = scmp.ne.s32.totalorder %s27, %s28
      %p37 = scmp.eq.s32.totalorder %s22, 0
      %p38 = por %p36, %p37
      %p39 = scmp.ne.s32.totalorder %s27, %s28
      %p40 = scmp.eq.s32.totalorder %s23, 1
      %p41 = por %p39, %p40
      %p43 = scmp.ne.s32.totalorder %s28, %s42
      %p44 = scmp.eq.s32.totalorder %s23, 0
      %p45 = por %p43, %p44
      %s47 = sadd.s32 %s46, 1
      %p50 = scmp.eq.s32.totalorder %s17, 1
      %p51 = scmp.ne.s32.totalorder %s46, %s48
      %p52 = scmp.eq.s32.totalorder %s17, 0
      %p53 = por %p51, %p52
      %p54 = scmp.ne.s32.totalorder %s46, %s48
      %p55 = scmp.eq.s32.totalorder %s22, 1
      %p56 = por %p54, %p55
      %p57 = scmp.ne.s32.totalorder %s48, %s49
      %p58 = scmp.eq.s32.totalorder %s22, 0
      %p59 = por %p57, %p58
      %p60 = scmp.ne.s32.totalorder %s48, %s49
      %p61 = scmp.eq.s32.totalorder %s23, 1
      %p62 = por %p60, %p61
      %p64 = scmp.ne.s32.totalorder %s49, %s63
      %p65 = scmp.eq.s32.totalorder %s23, 0
      %p66 = por %p64, %p65
      %s67 = ssub.s32 %s17, %s24
      %p68 = scmp.eq.s32.totalorder %s67, 0
      %s70 = sadd.s32 %s69, 1
      %s71 = scalar_select %p68, %s69, %s70
      %p74 = pneg %p68
      %p75 = scmp.eq.s32.totalorder %s17, 1
      %p76 = por %p74, %p75
      %p77 = scmp.ne.s32.totalorder %s69, %s72
      %p78 = scmp.eq.s32.totalorder %s17, 0
      %p79 = por %p77, %p78
      %p80 = scmp.ne.s32.totalorder %s69, %s72
      %p81 = scmp.eq.s32.totalorder %s22, 1
      %p82 = por %p80, %p81
      %p83 = scmp.ne.s32.totalorder %s72, %s73
      %p84 = scmp.eq.s32.totalorder %s22, 0
      %p85 = por %p83, %p84
      %p86 = scmp.ne.s32.totalorder %s72, %s73
      %p87 = scmp.eq.s32.totalorder %s23, 1
      %p88 = por %p86, %p87
      %p90 = scmp.ne.s32.totalorder %s73, %s89
      %p91 = scmp.eq.s32.totalorder %s23, 0
      %p92 = por %p90, %p91
      %s93 = ssub.s32 %s17, %s24
      %p94 = scmp.eq.s32.totalorder %s93, 0
      %s96 = sadd.s32 %s95, 1
      %s97 = scalar_select %p94, %s95, %s96
      %p100 = pneg %p94
      %p101 = scmp.eq.s32.totalorder %s17, 1
      %p102 = por %p100, %p101
      %p103 = scmp.ne.s32.totalorder %s95, %s98
      %p104 = scmp.eq.s32.totalorder %s17, 0
      %p105 = por %p103, %p104
      %p106 = scmp.ne.s32.totalorder %s95, %s98
      %p107 = scmp.eq.s32.totalorder %s22, 1
      %p108 = por %p106, %p107
      %p109 = scmp.ne.s32.totalorder %s98, %s99
      %p110 = scmp.eq.s32.totalorder %s22, 0
      %p111 = por %p109, %p110
      %p112 = scmp.ne.s32.totalorder %s98, %s99
      %p113 = scmp.eq.s32.totalorder %s23, 1
      %p114 = por %p112, %p113
      %p116 = scmp.ne.s32.totalorder %s99, %s115
      %p117 = scmp.eq.s32.totalorder %s23, 0
      %p118 = por %p116, %p117
      %p119 = scmp.le.s32.totalorder 1, %s17
      %p120 = scmp.lt.s32.totalorder %s17, 3
      %p121 = pnand %p119, %p120
      %p122 = pneg %p121
      // Predicated region
      $region9: #{tpu_custom_call.1} parent=5 // pred_check
        _
      $region10: #{tpu_custom_call.1} parent=5 // pred_check_branch
        %124 = sbr.rel (%p121) target = $region12
      $region11: #{tpu_custom_call.1} parent=5 // pred_region
        %s125 = ssub.s32 %s17, 1
        // Predicated region
        $region13: #{tpu_custom_call.1} parent=11 // pred_check
          %p126 = pneg %p38
        $region14: #{tpu_custom_call.1} parent=11 // pred_check_branch
          %128 = sbr.rel (%p126) target = $region16
        $region15: #{tpu_custom_call.1} parent=11 // pred_region
          %s130 = ssub.s32 16, 16
          %131 = vsyncadd [#allocation8], %s130
          %s133 = sshll.u32 %s0, 4
          %s134 = int_to_ptr.vmem [resolvable:$true] %s133
          %136 = dma.vmem_to_smem %s134, 16, [#allocation5], [#allocation8]
        $region16: #{tpu_custom_call.1} parent=11 // pred_fallthru
          _
        // Predicated region
        $region17: #{tpu_custom_call.1} parent=11 // pred_check
          %p137 = pneg %p59
        $region18: #{tpu_custom_call.1} parent=11 // pred_check_branch
          %139 = sbr.rel (%p137) target = $region20
        $region19: #{tpu_custom_call.1} parent=11 // pred_region
          _
        $region20: #{tpu_custom_call.1} parent=11 // pred_fallthru
          _
      $region12: #{tpu_custom_call.1} parent=5 // pred_fallthru
        _
      %p140 = scmp.lt.s32.totalorder %s17, 2
      // Predicated region
      $region21: #{tpu_custom_call.1} parent=5 // pred_check
        %p141 = pneg %p140
      $region22: #{tpu_custom_call.1} parent=5 // pred_check_branch
        %143 = sbr.rel (%p141) target = $region24
      $region23: #{tpu_custom_call.1} parent=5 // pred_region
        // Predicated region
        $region25: #{tpu_custom_call.1} parent=23 // pred_check
          %p144 = pneg %p79
        $region26: #{tpu_custom_call.1} parent=23 // pred_check_branch
          %146 = sbr.rel (%p144) target = $region28
        $region27: #{tpu_custom_call.1} parent=23 // pred_region
          %s147 = sand.u32 %s69, 1
          %s148 = scalar_lea.sflag [#allocation6], %s147
          %s149 = sand.u32 %s69, 1
          %s150 = smul.addr %s149, 8
          %s151 = scalar_lea.vmem [#allocation9], %s150
          %s153 = ssub.s32 128, 128
          %154 = vsyncadd %s148, %s153
          %s155 = smul.addr %s17, 2
          %s156 = smul.addr %s155, 64
          %s157 = scalar_lea.hbm %s2, %s156
          %s159 = sshll.u32 %s151, 4
          %s160 = int_to_ptr.vmem [resolvable:$true] %s159
          %162 = dma.hbm_to_vmem [thread:$0]  %s157, 128, %s160, %s148
        $region28: #{tpu_custom_call.1} parent=23 // pred_fallthru
          _
      $region24: #{tpu_custom_call.1} parent=5 // pred_fallthru
        _
      %p163 = scmp.le.s32.totalorder 1, %s17
      %p164 = scmp.lt.s32.totalorder %s17, 3
      %p165 = pnand %p163, %p164
      %p166 = pneg %p165
      // Predicated region
      $region29: #{tpu_custom_call.1} parent=5 // pred_check
        _
      $region30: #{tpu_custom_call.1} parent=5 // pred_check_branch
        %168 = sbr.rel (%p165) target = $region32
      $region31: #{tpu_custom_call.1} parent=5 // pred_region
        %s169 = ssub.s32 %s17, 1
        // Predicated region
        $region33: #{tpu_custom_call.1} parent=31 // pred_check
          %p170 = pneg %p38
        $region34: #{tpu_custom_call.1} parent=31 // pred_check_branch
          %172 = sbr.rel (%p170) target = $region36
        $region35: #{tpu_custom_call.1} parent=31 // pred_region
          %173 = dma.done [#allocation8], 16
        $region36: #{tpu_custom_call.1} parent=31 // pred_fallthru
          _
        %s174 = sand.u32 %s72, 1
        %s175 = scalar_lea.sflag [#allocation6], %s174
        %s176 = sand.u32 %s72, 1
        %s177 = smul.addr %s176, 8
        %s178 = scalar_lea.vmem [#allocation9], %s177
        // Predicated region
        $region37: #{tpu_custom_call.1} parent=31 // pred_check
          %p179 = pneg %p85
        $region38: #{tpu_custom_call.1} parent=31 // pred_check_branch
          %181 = sbr.rel (%p179) target = $region40
        $region39: #{tpu_custom_call.1} parent=31 // pred_region
          %182 = dma.done %s175, 128
        $region40: #{tpu_custom_call.1} parent=31 // pred_fallthru
          _
        %183 = sfence
        %p184 = pneg %p38
        %p185 = pneg %p35
        %p186 = pneg %p59
        %p187 = pneg %p56
        %s188 = sand.u32 %s72, 1
        %s189 = scalar_lea.sflag [#allocation6], %s188
        %s190 = sand.u32 %s72, 1
        %s191 = smul.addr %s190, 8
        %s192 = scalar_lea.vmem [#allocation9], %s191
        %p193 = pneg %p85
        %p194 = pneg %p82
        %p195 = pneg %p111
        %p196 = pneg %p108
        %s197 = sand.u32 %s98, 1
        %s198 = scalar_lea.sflag [#allocation7], %s197
        %s199 = sand.u32 %s98, 1
        %s200 = smul.addr %s199, 8
        %s201 = scalar_lea.vmem [#allocation10], %s200
        %s202 = sld [smem:[#allocation5]]
        %s203 = sld [smem:[#allocation5 + $0x1]]
        %s204 = sld [smem:[#allocation5 + $0x2]]
        %s205 = sld [smem:[#allocation5 + $0x3]]
        %s206 = sld [smem:[#allocation5 + $0x4]]
        %s207 = sld [smem:[#allocation5 + $0x5]]
        %s208 = sld [smem:[#allocation5 + $0x6]]
        %s209 = sld [smem:[#allocation5 + $0x7]]
        %s210 = sld [smem:[#allocation5 + $0x8]]
        %s211 = sld [smem:[#allocation5 + $0x9]]
        %s212 = sld [smem:[#allocation5 + $0xa]]
        %s213 = sld [smem:[#allocation5 + $0xb]]
        %s214 = sld [smem:[#allocation5 + $0xc]]
        %s215 = sld [smem:[#allocation5 + $0xd]]
        %s216 = sld [smem:[#allocation5 + $0xe]]
        %s217 = sld [smem:[#allocation5 + $0xf]]
        %s218 = sld [smem:[#allocation5 + $0x10]]
        %s219 = sld [smem:[#allocation5 + $0x11]]
        %s220 = sld [smem:[#allocation5 + $0x12]]
        %s221 = sld [smem:[#allocation5 + $0x13]]
        %s222 = sld [smem:[#allocation5 + $0x14]]
        %s223 = sld [smem:[#allocation5 + $0x15]]
        %s224 = sld [smem:[#allocation5 + $0x16]]
        %s225 = sld [smem:[#allocation5 + $0x17]]
        %s226 = sld [smem:[#allocation5 + $0x18]]
        %s227 = sld [smem:[#allocation5 + $0x19]]
        %s228 = sld [smem:[#allocation5 + $0x1a]]
        %s229 = sld [smem:[#allocation5 + $0x1b]]
        %s230 = sld [smem:[#allocation5 + $0x1c]]
        %s231 = sld [smem:[#allocation5 + $0x1d]]
        %s232 = sld [smem:[#allocation5 + $0x1e]]
        %s233 = sld [smem:[#allocation5 + $0x1f]]
        %s234 = sld [smem:[#allocation5 + $0x20]]
        %s235 = sld [smem:[#allocation5 + $0x21]]
        %s236 = sld [smem:[#allocation5 + $0x22]]
        %s237 = sld [smem:[#allocation5 + $0x23]]
        %s238 = sld [smem:[#allocation5 + $0x24]]
        %s239 = sld [smem:[#allocation5 + $0x25]]
        %s240 = sld [smem:[#allocation5 + $0x26]]
        %s241 = sld [smem:[#allocation5 + $0x27]]
        %s242 = sld [smem:[#allocation5 + $0x28]]
        %s243 = sld [smem:[#allocation5 + $0x29]]
        %s244 = sld [smem:[#allocation5 + $0x2a]]
        %s245 = sld [smem:[#allocation5 + $0x2b]]
        %s246 = sld [smem:[#allocation5 + $0x2c]]
        %s247 = sld [smem:[#allocation5 + $0x2d]]
        %s248 = sld [smem:[#allocation5 + $0x2e]]
        %s249 = sld [smem:[#allocation5 + $0x2f]]
        %s250 = sld [smem:[#allocation5 + $0x30]]
        %s251 = sld [smem:[#allocation5 + $0x31]]
        %s252 = sld [smem:[#allocation5 + $0x32]]
        %s253 = sld [smem:[#allocation5 + $0x33]]
        %s254 = sld [smem:[#allocation5 + $0x34]]
        %s255 = sld [smem:[#allocation5 + $0x35]]
        %s256 = sld [smem:[#allocation5 + $0x36]]
        %s257 = sld [smem:[#allocation5 + $0x37]]
        %s258 = sld [smem:[#allocation5 + $0x38]]
        %s259 = sld [smem:[#allocation5 + $0x39]]
        %s260 = sld [smem:[#allocation5 + $0x3a]]
        %s261 = sld [smem:[#allocation5 + $0x3b]]
        %s262 = sld [smem:[#allocation5 + $0x3c]]
        %s263 = sld [smem:[#allocation5 + $0x3d]]
        %s264 = sld [smem:[#allocation5 + $0x3e]]
        %s265 = sld [smem:[#allocation5 + $0x3f]]
        %s266 = sld [smem:[#allocation5 + $0x40]]
        %s267 = sld [smem:[#allocation5 + $0x41]]
        %s268 = sld [smem:[#allocation5 + $0x42]]
        %s269 = sld [smem:[#allocation5 + $0x43]]
        %s270 = sld [smem:[#allocation5 + $0x44]]
        %s271 = sld [smem:[#allocation5 + $0x45]]
        %s272 = sld [smem:[#allocation5 + $0x46]]
        %s273 = sld [smem:[#allocation5 + $0x47]]
        %s274 = sld [smem:[#allocation5 + $0x48]]
        %s275 = sld [smem:[#allocation5 + $0x49]]
        %s276 = sld [smem:[#allocation5 + $0x4a]]
        %s277 = sld [smem:[#allocation5 + $0x4b]]
        %s278 = sld [smem:[#allocation5 + $0x4c]]
        %s279 = sld [smem:[#allocation5 + $0x4d]]
        %s280 = sld [smem:[#allocation5 + $0x4e]]
        %s281 = sld [smem:[#allocation5 + $0x4f]]
        %s282 = sld [smem:[#allocation5 + $0x50]]
        %s283 = sld [smem:[#allocation5 + $0x51]]
        %s284 = sld [smem:[#allocation5 + $0x52]]
        %s285 = sld [smem:[#allocation5 + $0x53]]
        %s286 = sld [smem:[#allocation5 + $0x54]]
        %s287 = sld [smem:[#allocation5 + $0x55]]
        %s288 = sld [smem:[#allocation5 + $0x56]]
        %s289 = sld [smem:[#allocation5 + $0x57]]
        %s290 = sld [smem:[#allocation5 + $0x58]]
        %s291 = sld [smem:[#allocation5 + $0x59]]
        %s292 = sld [smem:[#allocation5 + $0x5a]]
        %s293 = sld [smem:[#allocation5 + $0x5b]]
        %s294 = sld [smem:[#allocation5 + $0x5c]]
        %s295 = sld [smem:[#allocation5 + $0x5d]]
        %s296 = sld [smem:[#allocation5 + $0x5e]]
        %s297 = sld [smem:[#allocation5 + $0x5f]]
        %s298 = sld [smem:[#allocation5 + $0x60]]
        %s299 = sld [smem:[#allocation5 + $0x61]]
        %s300 = sld [smem:[#allocation4]]
        %v301 = vld [vmem:[%s178] sm:$0xff]
        %v303 = vcombine.high %v301, %v301
        %vm305 = vcmask 1043456
        %v306 = vsel %vm305, %v301, 0.0
        %v307 = vrot.slane %v306, 4
        %v308 = vadd.f32 %v306, %v307
        %v309 = vrot.slane %v308, 2
        %v310 = vadd.f32 %v308, %v309
        %v311 = vrot.slane %v310, 1
        %v312 = vadd.f32 %v310, %v311
        %v313 = vsel %vm305, %v303, 0.0
        %v314 = vrot.slane %v313, 4
        %v315 = vadd.f32 %v313, %v314
        %v316 = vrot.slane %v315, 2
        %v317 = vadd.f32 %v315, %v316
        %v318 = vrot.slane %v317, 1
        %v319 = vadd.f32 %v317, %v318
        %v320 = vsel %vm305, %v301, -inf
        %v321 = vrot.slane %v320, 4
        %v322 = vmax.f32 %v320, %v321
        %v323 = vrot.slane %v322, 2
        %v324 = vmax.f32 %v322, %v323
        %v325 = vrot.slane %v324, 1
        %v326 = vmax.f32 %v324, %v325
        %v327 = vsel %vm305, %v303, -inf
        %v328 = vrot.slane %v327, 4
        %v329 = vmax.f32 %v327, %v328
        %v330 = vrot.slane %v329, 2
        %v331 = vmax.f32 %v329, %v330
        %v332 = vrot.slane %v331, 1
        %v333 = vmax.f32 %v331, %v332
        %v334 = vmul.f32 %v312, 0.25
        %v335 = vmul.f32 %v319, 0.25
        %337 = vrot.lane.b32.xlu0 %v334, 112
        %v338 = vpop.permute.xlu0 %337
        %340 = vrot.lane.b32.xlu0 %v334, 96
        %v341 = vpop.permute.xlu0 %340
        %343 = vrot.lane.b32.xlu0 %v334, 80
        %v344 = vpop.permute.xlu0 %343
        %346 = vrot.lane.b32.xlu0 %v334, 64
        %v347 = vpop.permute.xlu0 %346
        %349 = vrot.lane.b32.xlu0 %v334, 48
        %v350 = vpop.permute.xlu0 %349
        %352 = vrot.lane.b32.xlu0 %v334, 32
        %v353 = vpop.permute.xlu0 %352
        %355 = vrot.lane.b32.xlu0 %v334, 16
        %v356 = vpop.permute.xlu0 %355
        %359 = vrot.lane.b32.xlu0 %v335, 112
        %v360 = vpop.permute.xlu0 %359
        %362 = vrot.lane.b32.xlu0 %v335, 96
        %v363 = vpop.permute.xlu0 %362
        %365 = vrot.lane.b32.xlu0 %v335, 80
        %v366 = vpop.permute.xlu0 %365
        %368 = vrot.lane.b32.xlu0 %v335, 64
        %v369 = vpop.permute.xlu0 %368
        %371 = vrot.lane.b32.xlu0 %v335, 48
        %v372 = vpop.permute.xlu0 %371
        %374 = vrot.lane.b32.xlu0 %v335, 32
        %v375 = vpop.permute.xlu0 %374
        %377 = vrot.lane.b32.xlu0 %v335, 16
        %v378 = vpop.permute.xlu0 %377
        %v380 = vcombine.low %v334, %v341
        %v382 = vunpack.c.l.s4 1983009808
        %v383 = vunpack.c.0.s8 %v382
        %v384 = vlaneseq
        %v385 = vshrl.u32 %v384, 7
        %v386 = vsub.s32 %v383, %v385
        %v387 = vrot.slane %v380, %v386
        %v388 = vcombine.low %v338, %v344
        %v390 = vunpack.c.l.s4 1983009808
        %v391 = vunpack.c.0.s8 %v390
        %v392 = vlaneseq
        %v393 = vshrl.u32 %v392, 7
        %v394 = vsub.s32 %v391, %v393
        %v395 = vrot.slane %v388, %v394
        %v396 = vcombine.low %v347, %v353
        %v398 = vunpack.c.l.s4 1983009808
        %v399 = vunpack.c.0.s8 %v398
        %v400 = vlaneseq
        %v401 = vshrl.u32 %v400, 7
        %v402 = vsub.s32 %v399, %v401
        %v403 = vrot.slane %v396, %v402
        %v404 = vcombine.low %v350, %v356
        %v406 = vunpack.c.l.s4 1983009808
        %v407 = vunpack.c.0.s8 %v406
        %v408 = vlaneseq
        %v409 = vshrl.u32 %v408, 7
        %v410 = vsub.s32 %v407, %v409
        %v411 = vrot.slane %v404, %v410
        %v412 = vcombine.low %v387, %v395
        %v414 = vunpack.c.l.s4 1934713408
        %v415 = vunpack.c.0.s8 %v414
        %v416 = vlaneseq
        %v417 = vshrl.u32 %v416, 7
        %v418 = vsub.s32 %v415, %v417
        %v419 = vrot.slane %v412, %v418
        %v420 = vcombine.low %v403, %v411
        %v422 = vunpack.c.l.s4 1934713408
        %v423 = vunpack.c.0.s8 %v422
        %v424 = vlaneseq
        %v425 = vshrl.u32 %v424, 7
        %v426 = vsub.s32 %v423, %v425
        %v427 = vrot.slane %v420, %v426
        %v428 = vcombine.low %v419, %v427
        %v429 = vcombine.low %v335, %v363
        %v431 = vunpack.c.l.s4 1983009808
        %v432 = vunpack.c.0.s8 %v431
        %v433 = vlaneseq
        %v434 = vshrl.u32 %v433, 7
        %v435 = vsub.s32 %v432, %v434
        %v436 = vrot.slane %v429, %v435
        %v437 = vcombine.low %v360, %v366
        %v439 = vunpack.c.l.s4 1983009808
        %v440 = vunpack.c.0.s8 %v439
        %v441 = vlaneseq
        %v442 = vshrl.u32 %v441, 7
        %v443 = vsub.s32 %v440, %v442
        %v444 = vrot.slane %v437, %v443
        %v445 = vcombine.low %v369, %v375
        %v447 = vunpack.c.l.s4 1983009808
        %v448 = vunpack.c.0.s8 %v447
        %v449 = vlaneseq
        %v450 = vshrl.u32 %v449, 7
        %v451 = vsub.s32 %v448, %v450
        %v452 = vrot.slane %v445, %v451
        %v453 = vcombine.low %v372, %v378
        %v455 = vunpack.c.l.s4 1983009808
        %v456 = vunpack.c.0.s8 %v455
        %v457 = vlaneseq
        %v458 = vshrl.u32 %v457, 7
        %v459 = vsub.s32 %v456, %v458
        %v460 = vrot.slane %v453, %v459
        %v461 = vcombine.low %v436, %v444
        %v463 = vunpack.c.l.s4 1934713408
        %v464 = vunpack.c.0.s8 %v463
        %v465 = vlaneseq
        %v466 = vshrl.u32 %v465, 7
        %v467 = vsub.s32 %v464, %v466
        %v468 = vrot.slane %v461, %v467
        %v469 = vcombine.low %v452, %v460
        %v471 = vunpack.c.l.s4 1934713408
        %v472 = vunpack.c.0.s8 %v471
        %v473 = vlaneseq
        %v474 = vshrl.u32 %v473, 7
        %v475 = vsub.s32 %v472, %v474
        %v476 = vrot.slane %v469, %v475
        %v477 = vcombine.low %v468, %v476
        %479 = vrot.lane.b32.xlu0 %v326, 112
        %v480 = vpop.permute.xlu0 %479
        %482 = vrot.lane.b32.xlu0 %v326, 96
        %v483 = vpop.permute.xlu0 %482
        %485 = vrot.lane.b32.xlu0 %v326, 80
        %v486 = vpop.permute.xlu0 %485
        %488 = vrot.lane.b32.xlu0 %v326, 64
        %v489 = vpop.permute.xlu0 %488
        %491 = vrot.lane.b32.xlu0 %v326, 48
        %v492 = vpop.permute.xlu0 %491
        %494 = vrot.lane.b32.xlu0 %v326, 32
        %v495 = vpop.permute.xlu0 %494
        %497 = vrot.lane.b32.xlu0 %v326, 16
        %v498 = vpop.permute.xlu0 %497
        %501 = vrot.lane.b32.xlu0 %v333, 112
        %v502 = vpop.permute.xlu0 %501
        %504 = vrot.lane.b32.xlu0 %v333, 96
        %v505 = vpop.permute.xlu0 %504
        %507 = vrot.lane.b32.xlu0 %v333, 80
        %v508 = vpop.permute.xlu0 %507
        %510 = vrot.lane.b32.xlu0 %v333, 64
        %v511 = vpop.permute.xlu0 %510
        %513 = vrot.lane.b32.xlu0 %v333, 48
        %v514 = vpop.permute.xlu0 %513
        %516 = vrot.lane.b32.xlu0 %v333, 32
        %v517 = vpop.permute.xlu0 %516
        %519 = vrot.lane.b32.xlu0 %v333, 16
        %v520 = vpop.permute.xlu0 %519
        %v522 = vcombine.low %v326, %v483
        %v524 = vunpack.c.l.s4 1983009808
        %v525 = vunpack.c.0.s8 %v524
        %v526 = vlaneseq
        %v527 = vshrl.u32 %v526, 7
        %v528 = vsub.s32 %v525, %v527
        %v529 = vrot.slane %v522, %v528
        %v530 = vcombine.low %v480, %v486
        %v532 = vunpack.c.l.s4 1983009808
        %v533 = vunpack.c.0.s8 %v532
        %v534 = vlaneseq
        %v535 = vshrl.u32 %v534, 7
        %v536 = vsub.s32 %v533, %v535
        %v537 = vrot.slane %v530, %v536
        %v538 = vcombine.low %v489, %v495
        %v540 = vunpack.c.l.s4 1983009808
        %v541 = vunpack.c.0.s8 %v540
        %v542 = vlaneseq
        %v543 = vshrl.u32 %v542, 7
        %v544 = vsub.s32 %v541, %v543
        %v545 = vrot.slane %v538, %v544
        %v546 = vcombine.low %v492, %v498
        %v548 = vunpack.c.l.s4 1983009808
        %v549 = vunpack.c.0.s8 %v548
        %v550 = vlaneseq
        %v551 = vshrl.u32 %v550, 7
        %v552 = vsub.s32 %v549, %v551
        %v553 = vrot.slane %v546, %v552
        %v554 = vcombine.low %v529, %v537
        %v556 = vunpack.c.l.s4 1934713408
        %v557 = vunpack.c.0.s8 %v556
        %v558 = vlaneseq
        %v559 = vshrl.u32 %v558, 7
        %v560 = vsub.s32 %v557, %v559
        %v561 = vrot.slane %v554, %v560
        %v562 = vcombine.low %v545, %v553
        %v564 = vunpack.c.l.s4 1934713408
        %v565 = vunpack.c.0.s8 %v564
        %v566 = vlaneseq
        %v567 = vshrl.u32 %v566, 7
        %v568 = vsub.s32 %v565, %v567
        %v569 = vrot.slane %v562, %v568
        %v570 = vcombine.low %v561, %v569
        %v571 = vcombine.low %v333, %v505
        %v573 = vunpack.c.l.s4 1983009808
        %v574 = vunpack.c.0.s8 %v573
        %v575 = vlaneseq
        %v576 = vshrl.u32 %v575, 7
        %v577 = vsub.s32 %v574, %v576
        %v578 = vrot.slane %v571, %v577
        %v579 = vcombine.low %v502, %v508
        %v581 = vunpack.c.l.s4 1983009808
        %v582 = vunpack.c.0.s8 %v581
        %v583 = vlaneseq
        %v584 = vshrl.u32 %v583, 7
        %v585 = vsub.s32 %v582, %v584
        %v586 = vrot.slane %v579, %v585
        %v587 = vcombine.low %v511, %v517
        %v589 = vunpack.c.l.s4 1983009808
        %v590 = vunpack.c.0.s8 %v589
        %v591 = vlaneseq
        %v592 = vshrl.u32 %v591, 7
        %v593 = vsub.s32 %v590, %v592
        %v594 = vrot.slane %v587, %v593
        %v595 = vcombine.low %v514, %v520
        %v597 = vunpack.c.l.s4 1983009808
        %v598 = vunpack.c.0.s8 %v597
        %v599 = vlaneseq
        %v600 = vshrl.u32 %v599, 7
        %v601 = vsub.s32 %v598, %v600
        %v602 = vrot.slane %v595, %v601
        %v603 = vcombine.low %v578, %v586
        %v605 = vunpack.c.l.s4 1934713408
        %v606 = vunpack.c.0.s8 %v605
        %v607 = vlaneseq
        %v608 = vshrl.u32 %v607, 7
        %v609 = vsub.s32 %v606, %v608
        %v610 = vrot.slane %v603, %v609
        %v611 = vcombine.low %v594, %v602
        %v613 = vunpack.c.l.s4 1934713408
        %v614 = vunpack.c.0.s8 %v613
        %v615 = vlaneseq
        %v616 = vshrl.u32 %v615, 7
        %v617 = vsub.s32 %v614, %v616
        %v618 = vrot.slane %v611, %v617
        %v619 = vcombine.low %v610, %v618
        %620 = vst [vmem:[#allocation2] sm:$0x7] 0.0
        %621 = vst [vmem:[#allocation3] sm:$0x7] 0.0
        %622 = vst [vmem:[#allocation2 + $0x13] sm:$0x1f] 0.0
        %623 = vst [vmem:[#allocation3 + $0x13] sm:$0x1f] 0.0
        %vm624 = vcmask 1047680
        %625 = vst.msk [vmem:[#allocation2 + $0x3] sm:$0xff] %vm624, 0.0
        %626 = vst.msk [vmem:[#allocation2 + $0xb] sm:$0xff] %vm624, 0.0
        %627 = vst.msk [vmem:[#allocation3 + $0x3] sm:$0xff] %vm624, 0.0
        %628 = vst.msk [vmem:[#allocation3 + $0xb] sm:$0xff] %vm624, 0.0
        %vm629 = vcmask 130048
        %630 = vst.msk [vmem:[#allocation2 + $0x3] sm:$0xff] %vm629, %v428
        %631 = vst.msk [vmem:[#allocation2 + $0xb] sm:$0xff] %vm629, %v477
        %632 = vst.msk [vmem:[#allocation3 + $0x3] sm:$0xff] %vm629, %v570
        %633 = vst.msk [vmem:[#allocation3 + $0xb] sm:$0xff] %vm629, %v619
        %v634 = vld [vmem:[#allocation2] sm:$0xff]
        %v635 = vld [vmem:[#allocation2 + $0x8] sm:$0xff]
        %v636 = vld [vmem:[#allocation2 + $0x10] sm:$0x3f]
        %v637 = vld [vmem:[#allocation3] sm:$0xff]
        %v638 = vld [vmem:[#allocation3 + $0x8] sm:$0xff]
        %v639 = vld [vmem:[#allocation3 + $0x10] sm:$0x3f]
        %640 = vrot.lane.b32.xlu0 %v634, 3
        %v641 = vpop.permute.xlu0 %640
        %642 = vrot.lane.b32.xlu0 %v635, 3
        %v643 = vpop.permute.xlu0 %642
        %644 = vrot.lane.b32.xlu0 %v636, 3
        %v645 = vpop.permute.xlu0 %644
        %646 = vrot.lane.b32.xlu0 %v637, 3
        %v647 = vpop.permute.xlu0 %646
        %648 = vrot.lane.b32.xlu0 %v638, 3
        %v649 = vpop.permute.xlu0 %648
        %650 = vrot.lane.b32.xlu0 %v639, 3
        %v651 = vpop.permute.xlu0 %650
        %v652 = vstv %s202
        %v653 = vmul.f32 %v652, %v641
        %v654 = vmul.f32 %v652, %v643
        %v655 = vadd.f32 %v653, 0.0
        %v656 = vadd.f32 %v654, 0.0
        %v657 = vstv %s251
        %v658 = vmul.f32 %v657, %v647
        %v659 = vmul.f32 %v657, %v649
        %v660 = vadd.f32 %v658, 0.0
        %v661 = vadd.f32 %v659, 0.0
        %v662 = vstv %s209
        %v663 = vmul.f32 %v662, %v641
        %v664 = vmul.f32 %v662, %v643
        %v665 = vmul.f32 %v662, %v645
        %vm669 = vcmask 1046528
        %v670 = vrot.slane %v663, 1
        %v671 = vrot.slane %v664, 1
        %v672 = vsel %vm669, %v670, %v671
        %v673 = vrot.slane %v665, 1
        %v674 = vsel %vm669, %v671, %v673
        %v677 = vadd.f32 %v655, %v672
        %v678 = vadd.f32 %v656, %v674
        %v679 = vstv %s258
        %v680 = vmul.f32 %v679, %v647
        %v681 = vmul.f32 %v679, %v649
        %v682 = vmul.f32 %v679, %v651
        %v686 = vrot.slane %v680, 1
        %v687 = vrot.slane %v681, 1
        %v688 = vsel %vm669, %v686, %v687
        %v689 = vrot.slane %v682, 1
        %v690 = vsel %vm669, %v687, %v689
        %v693 = vadd.f32 %v660, %v688
        %v694 = vadd.f32 %v661, %v690
        %v695 = vstv %s216
        %v696 = vmul.f32 %v695, %v641
        %v697 = vmul.f32 %v695, %v643
        %v698 = vmul.f32 %v695, %v645
        %vm702 = vcmask 1045504
        %v703 = vrot.slane %v696, 2
        %v704 = vrot.slane %v697, 2
        %v705 = vsel %vm702, %v703, %v704
        %v706 = vrot.slane %v698, 2
        %v707 = vsel %vm702, %v704, %v706
        %v710 = vadd.f32 %v677, %v705
        %v711 = vadd.f32 %v678, %v707
        %v712 = vstv %s265
        %v713 = vmul.f32 %v712, %v647
        %v714 = vmul.f32 %v712, %v649
        %v715 = vmul.f32 %v712, %v651
        %v719 = vrot.slane %v713, 2
        %v720 = vrot.slane %v714, 2
        %v721 = vsel %vm702, %v719, %v720
        %v722 = vrot.slane %v715, 2
        %v723 = vsel %vm702, %v720, %v722
        %v726 = vadd.f32 %v693, %v721
        %v727 = vadd.f32 %v694, %v723
        %v728 = vstv %s223
        %v729 = vmul.f32 %v728, %v641
        %v730 = vmul.f32 %v728, %v643
        %v731 = vmul.f32 %v728, %v645
        %vm735 = vcmask 1044480
        %v736 = vrot.slane %v729, 3
        %v737 = vrot.slane %v730, 3
        %v738 = vsel %vm735, %v736, %v737
        %v739 = vrot.slane %v731, 3
        %v740 = vsel %vm735, %v737, %v739
        %v743 = vadd.f32 %v710, %v738
        %v744 = vadd.f32 %v711, %v740
        %v745 = vstv %s272
        %v746 = vmul.f32 %v745, %v647
        %v747 = vmul.f32 %v745, %v649
        %v748 = vmul.f32 %v745, %v651
        %v752 = vrot.slane %v746, 3
        %v753 = vrot.slane %v747, 3
        %v754 = vsel %vm735, %v752, %v753
        %v755 = vrot.slane %v748, 3
        %v756 = vsel %vm735, %v753, %v755
        %v759 = vadd.f32 %v726, %v754
        %v760 = vadd.f32 %v727, %v756
        %v761 = vstv %s230
        %v762 = vmul.f32 %v761, %v641
        %v763 = vmul.f32 %v761, %v643
        %v764 = vmul.f32 %v761, %v645
        %v768 = vrot.slane %v762, 4
        %v769 = vrot.slane %v763, 4
        %v770 = vsel %vm305, %v768, %v769
        %v771 = vrot.slane %v764, 4
        %v772 = vsel %vm305, %v769, %v771
        %v775 = vadd.f32 %v743, %v770
        %v776 = vadd.f32 %v744, %v772
        %v777 = vstv %s279
        %v778 = vmul.f32 %v777, %v647
        %v779 = vmul.f32 %v777, %v649
        %v780 = vmul.f32 %v777, %v651
        %v784 = vrot.slane %v778, 4
        %v785 = vrot.slane %v779, 4
        %v786 = vsel %vm305, %v784, %v785
        %v787 = vrot.slane %v780, 4
        %v788 = vsel %vm305, %v785, %v787
        %v791 = vadd.f32 %v759, %v786
        %v792 = vadd.f32 %v760, %v788
        %v793 = vstv %s237
        %v794 = vmul.f32 %v793, %v641
        %v795 = vmul.f32 %v793, %v643
        %v796 = vmul.f32 %v793, %v645
        %vm800 = vcmask 1042432
        %v801 = vrot.slane %v794, 5
        %v802 = vrot.slane %v795, 5
        %v803 = vsel %vm800, %v801, %v802
        %v804 = vrot.slane %v796, 5
        %v805 = vsel %vm800, %v802, %v804
        %v808 = vadd.f32 %v775, %v803
        %v809 = vadd.f32 %v776, %v805
        %v810 = vstv %s286
        %v811 = vmul.f32 %v810, %v647
        %v812 = vmul.f32 %v810, %v649
        %v813 = vmul.f32 %v810, %v651
        %v817 = vrot.slane %v811, 5
        %v818 = vrot.slane %v812, 5
        %v819 = vsel %vm800, %v817, %v818
        %v820 = vrot.slane %v813, 5
        %v821 = vsel %vm800, %v818, %v820
        %v824 = vadd.f32 %v791, %v819
        %v825 = vadd.f32 %v792, %v821
        %v826 = vstv %s244
        %v827 = vmul.f32 %v826, %v641
        %v828 = vmul.f32 %v826, %v643
        %v829 = vmul.f32 %v826, %v645
        %vm833 = vcmask 1041408
        %v834 = vrot.slane %v827, 6
        %v835 = vrot.slane %v828, 6
        %v836 = vsel %vm833, %v834, %v835
        %v837 = vrot.slane %v829, 6
        %v838 = vsel %vm833, %v835, %v837
        %v841 = vadd.f32 %v808, %v836
        %v842 = vadd.f32 %v809, %v838
        %v843 = vstv %s293
        %v844 = vmul.f32 %v843, %v647
        %v845 = vmul.f32 %v843, %v649
        %v846 = vmul.f32 %v843, %v651
        %v850 = vrot.slane %v844, 6
        %v851 = vrot.slane %v845, 6
        %v852 = vsel %vm833, %v850, %v851
        %v853 = vrot.slane %v846, 6
        %v854 = vsel %vm833, %v851, %v853
        %v857 = vadd.f32 %v824, %v852
        %v858 = vadd.f32 %v825, %v854
        %859 = vrot.lane.b32.xlu0 %v634, 2
        %v860 = vpop.permute.xlu0 %859
        %861 = vrot.lane.b32.xlu0 %v635, 2
        %v862 = vpop.permute.xlu0 %861
        %863 = vrot.lane.b32.xlu0 %v636, 2
        %v864 = vpop.permute.xlu0 %863
        %865 = vrot.lane.b32.xlu0 %v637, 2
        %v866 = vpop.permute.xlu0 %865
        %867 = vrot.lane.b32.xlu0 %v638, 2
        %v868 = vpop.permute.xlu0 %867
        %869 = vrot.lane.b32.xlu0 %v639, 2
        %v870 = vpop.permute.xlu0 %869
        %v871 = vstv %s203
        %v872 = vmul.f32 %v871, %v860
        %v873 = vmul.f32 %v871, %v862
        %v874 = vadd.f32 %v841, %v872
        %v875 = vadd.f32 %v842, %v873
        %v876 = vstv %s252
        %v877 = vmul.f32 %v876, %v866
        %v878 = vmul.f32 %v876, %v868
        %v879 = vadd.f32 %v857, %v877
        %v880 = vadd.f32 %v858, %v878
        %v881 = vstv %s210
        %v882 = vmul.f32 %v881, %v860
        %v883 = vmul.f32 %v881, %v862
        %v884 = vmul.f32 %v881, %v864
        %v888 = vrot.slane %v882, 1
        %v889 = vrot.slane %v883, 1
        %v890 = vsel %vm669, %v888, %v889
        %v891 = vrot.slane %v884, 1
        %v892 = vsel %vm669, %v889, %v891
        %v895 = vadd.f32 %v874, %v890
        %v896 = vadd.f32 %v875, %v892
        %v897 = vstv %s259
        %v898 = vmul.f32 %v897, %v866
        %v899 = vmul.f32 %v897, %v868
        %v900 = vmul.f32 %v897, %v870
        %v904 = vrot.slane %v898, 1
        %v905 = vrot.slane %v899, 1
        %v906 = vsel %vm669, %v904, %v905
        %v907 = vrot.slane %v900, 1
        %v908 = vsel %vm669, %v905, %v907
        %v911 = vadd.f32 %v879, %v906
        %v912 = vadd.f32 %v880, %v908
        %v913 = vstv %s217
        %v914 = vmul.f32 %v913, %v860
        %v915 = vmul.f32 %v913, %v862
        %v916 = vmul.f32 %v913, %v864
        %v920 = vrot.slane %v914, 2
        %v921 = vrot.slane %v915, 2
        %v922 = vsel %vm702, %v920, %v921
        %v923 = vrot.slane %v916, 2
        %v924 = vsel %vm702, %v921, %v923
        %v927 = vadd.f32 %v895, %v922
        %v928 = vadd.f32 %v896, %v924
        %v929 = vstv %s266
        %v930 = vmul.f32 %v929, %v866
        %v931 = vmul.f32 %v929, %v868
        %v932 = vmul.f32 %v929, %v870
        %v936 = vrot.slane %v930, 2
        %v937 = vrot.slane %v931, 2
        %v938 = vsel %vm702, %v936, %v937
        %v939 = vrot.slane %v932, 2
        %v940 = vsel %vm702, %v937, %v939
        %v943 = vadd.f32 %v911, %v938
        %v944 = vadd.f32 %v912, %v940
        %v945 = vstv %s224
        %v946 = vmul.f32 %v945, %v860
        %v947 = vmul.f32 %v945, %v862
        %v948 = vmul.f32 %v945, %v864
        %v952 = vrot.slane %v946, 3
        %v953 = vrot.slane %v947, 3
        %v954 = vsel %vm735, %v952, %v953
        %v955 = vrot.slane %v948, 3
        %v956 = vsel %vm735, %v953, %v955
        %v959 = vadd.f32 %v927, %v954
        %v960 = vadd.f32 %v928, %v956
        %v961 = vstv %s273
        %v962 = vmul.f32 %v961, %v866
        %v963 = vmul.f32 %v961, %v868
        %v964 = vmul.f32 %v961, %v870
        %v968 = vrot.slane %v962, 3
        %v969 = vrot.slane %v963, 3
        %v970 = vsel %vm735, %v968, %v969
        %v971 = vrot.slane %v964, 3
        %v972 = vsel %vm735, %v969, %v971
        %v975 = vadd.f32 %v943, %v970
        %v976 = vadd.f32 %v944, %v972
        %v977 = vstv %s231
        %v978 = vmul.f32 %v977, %v860
        %v979 = vmul.f32 %v977, %v862
        %v980 = vmul.f32 %v977, %v864
        %v984 = vrot.slane %v978, 4
        %v985 = vrot.slane %v979, 4
        %v986 = vsel %vm305, %v984, %v985
        %v987 = vrot.slane %v980, 4
        %v988 = vsel %vm305, %v985, %v987
        %v991 = vadd.f32 %v959, %v986
        %v992 = vadd.f32 %v960, %v988
        %v993 = vstv %s280
        %v994 = vmul.f32 %v993, %v866
        %v995 = vmul.f32 %v993, %v868
        %v996 = vmul.f32 %v993, %v870
        %v1000 = vrot.slane %v994, 4
        %v1001 = vrot.slane %v995, 4
        %v1002 = vsel %vm305, %v1000, %v1001
        %v1003 = vrot.slane %v996, 4
        %v1004 = vsel %vm305, %v1001, %v1003
        %v1007 = vadd.f32 %v975, %v1002
        %v1008 = vadd.f32 %v976, %v1004
        %v1009 = vstv %s238
        %v1010 = vmul.f32 %v1009, %v860
        %v1011 = vmul.f32 %v1009, %v862
        %v1012 = vmul.f32 %v1009, %v864
        %v1016 = vrot.slane %v1010, 5
        %v1017 = vrot.slane %v1011, 5
        %v1018 = vsel %vm800, %v1016, %v1017
        %v1019 = vrot.slane %v1012, 5
        %v1020 = vsel %vm800, %v1017, %v1019
        %v1023 = vadd.f32 %v991, %v1018
        %v1024 = vadd.f32 %v992, %v1020
        %v1025 = vstv %s287
        %v1026 = vmul.f32 %v1025, %v866
        %v1027 = vmul.f32 %v1025, %v868
        %v1028 = vmul.f32 %v1025, %v870
        %v1032 = vrot.slane %v1026, 5
        %v1033 = vrot.slane %v1027, 5
        %v1034 = vsel %vm800, %v1032, %v1033
        %v1035 = vrot.slane %v1028, 5
        %v1036 = vsel %vm800, %v1033, %v1035
        %v1039 = vadd.f32 %v1007, %v1034
        %v1040 = vadd.f32 %v1008, %v1036
        %v1041 = vstv %s245
        %v1042 = vmul.f32 %v1041, %v860
        %v1043 = vmul.f32 %v1041, %v862
        %v1044 = vmul.f32 %v1041, %v864
        %v1048 = vrot.slane %v1042, 6
        %v1049 = vrot.slane %v1043, 6
        %v1050 = vsel %vm833, %v1048, %v1049
        %v1051 = vrot.slane %v1044, 6
        %v1052 = vsel %vm833, %v1049, %v1051
        %v1055 = vadd.f32 %v1023, %v1050
        %v1056 = vadd.f32 %v1024, %v1052
        %v1057 = vstv %s294
        %v1058 = vmul.f32 %v1057, %v866
        %v1059 = vmul.f32 %v1057, %v868
        %v1060 = vmul.f32 %v1057, %v870
        %v1064 = vrot.slane %v1058, 6
        %v1065 = vrot.slane %v1059, 6
        %v1066 = vsel %vm833, %v1064, %v1065
        %v1067 = vrot.slane %v1060, 6
        %v1068 = vsel %vm833, %v1065, %v1067
        %v1071 = vadd.f32 %v1039, %v1066
        %v1072 = vadd.f32 %v1040, %v1068
        %1073 = vrot.lane.b32.xlu0 %v634, 1
        %v1074 = vpop.permute.xlu0 %1073
        %1075 = vrot.lane.b32.xlu0 %v635, 1
        %v1076 = vpop.permute.xlu0 %1075
        %1077 = vrot.lane.b32.xlu0 %v636, 1
        %v1078 = vpop.permute.xlu0 %1077
        %1079 = vrot.lane.b32.xlu0 %v637, 1
        %v1080 = vpop.permute.xlu0 %1079
        %1081 = vrot.lane.b32.xlu0 %v638, 1
        %v1082 = vpop.permute.xlu0 %1081
        %1083 = vrot.lane.b32.xlu0 %v639, 1
        %v1084 = vpop.permute.xlu0 %1083
        %v1085 = vstv %s204
        %v1086 = vmul.f32 %v1085, %v1074
        %v1087 = vmul.f32 %v1085, %v1076
        %v1088 = vadd.f32 %v1055, %v1086
        %v1089 = vadd.f32 %v1056, %v1087
        %v1090 = vstv %s253
        %v1091 = vmul.f32 %v1090, %v1080
        %v1092 = vmul.f32 %v1090, %v1082
        %v1093 = vadd.f32 %v1071, %v1091
        %v1094 = vadd.f32 %v1072, %v1092
        %v1095 = vstv %s211
        %v1096 = vmul.f32 %v1095, %v1074
        %v1097 = vmul.f32 %v1095, %v1076
        %v1098 = vmul.f32 %v1095, %v1078
        %v1102 = vrot.slane %v1096, 1
        %v1103 = vrot.slane %v1097, 1
        %v1104 = vsel %vm669, %v1102, %v1103
        %v1105 = vrot.slane %v1098, 1
        %v1106 = vsel %vm669, %v1103, %v1105
        %v1109 = vadd.f32 %v1088, %v1104
        %v1110 = vadd.f32 %v1089, %v1106
        %v1111 = vstv %s260
        %v1112 = vmul.f32 %v1111, %v1080
        %v1113 = vmul.f32 %v1111, %v1082
        %v1114 = vmul.f32 %v1111, %v1084
        %v1118 = vrot.slane %v1112, 1
        %v1119 = vrot.slane %v1113, 1
        %v1120 = vsel %vm669, %v1118, %v1119
        %v1121 = vrot.slane %v1114, 1
        %v1122 = vsel %vm669, %v1119, %v1121
        %v1125 = vadd.f32 %v1093, %v1120
        %v1126 = vadd.f32 %v1094, %v1122
        %v1127 = vstv %s218
        %v1128 = vmul.f32 %v1127, %v1074
        %v1129 = vmul.f32 %v1127, %v1076
        %v1130 = vmul.f32 %v1127, %v1078
        %v1134 = vrot.slane %v1128, 2
        %v1135 = vrot.slane %v1129, 2
        %v1136 = vsel %vm702, %v1134, %v1135
        %v1137 = vrot.slane %v1130, 2
        %v1138 = vsel %vm702, %v1135, %v1137
        %v1141 = vadd.f32 %v1109, %v1136
        %v1142 = vadd.f32 %v1110, %v1138
        %v1143 = vstv %s267
        %v1144 = vmul.f32 %v1143, %v1080
        %v1145 = vmul.f32 %v1143, %v1082
        %v1146 = vmul.f32 %v1143, %v1084
        %v1150 = vrot.slane %v1144, 2
        %v1151 = vrot.slane %v1145, 2
        %v1152 = vsel %vm702, %v1150, %v1151
        %v1153 = vrot.slane %v1146, 2
        %v1154 = vsel %vm702, %v1151, %v1153
        %v1157 = vadd.f32 %v1125, %v1152
        %v1158 = vadd.f32 %v1126, %v1154
        %v1159 = vstv %s225
        %v1160 = vmul.f32 %v1159, %v1074
        %v1161 = vmul.f32 %v1159, %v1076
        %v1162 = vmul.f32 %v1159, %v1078
        %v1166 = vrot.slane %v1160, 3
        %v1167 = vrot.slane %v1161, 3
        %v1168 = vsel %vm735, %v1166, %v1167
        %v1169 = vrot.slane %v1162, 3
        %v1170 = vsel %vm735, %v1167, %v1169
        %v1173 = vadd.f32 %v1141, %v1168
        %v1174 = vadd.f32 %v1142, %v1170
        %v1175 = vstv %s274
        %v1176 = vmul.f32 %v1175, %v1080
        %v1177 = vmul.f32 %v1175, %v1082
        %v1178 = vmul.f32 %v1175, %v1084
        %v1182 = vrot.slane %v1176, 3
        %v1183 = vrot.slane %v1177, 3
        %v1184 = vsel %vm735, %v1182, %v1183
        %v1185 = vrot.slane %v1178, 3
        %v1186 = vsel %vm735, %v1183, %v1185
        %v1189 = vadd.f32 %v1157, %v1184
        %v1190 = vadd.f32 %v1158, %v1186
        %v1191 = vstv %s232
        %v1192 = vmul.f32 %v1191, %v1074
        %v1193 = vmul.f32 %v1191, %v1076
        %v1194 = vmul.f32 %v1191, %v1078
        %v1198 = vrot.slane %v1192, 4
        %v1199 = vrot.slane %v1193, 4
        %v1200 = vsel %vm305, %v1198, %v1199
        %v1201 = vrot.slane %v1194, 4
        %v1202 = vsel %vm305, %v1199, %v1201
        %v1205 = vadd.f32 %v1173, %v1200
        %v1206 = vadd.f32 %v1174, %v1202
        %v1207 = vstv %s281
        %v1208 = vmul.f32 %v1207, %v1080
        %v1209 = vmul.f32 %v1207, %v1082
        %v1210 = vmul.f32 %v1207, %v1084
        %v1214 = vrot.slane %v1208, 4
        %v1215 = vrot.slane %v1209, 4
        %v1216 = vsel %vm305, %v1214, %v1215
        %v1217 = vrot.slane %v1210, 4
        %v1218 = vsel %vm305, %v1215, %v1217
        %v1221 = vadd.f32 %v1189, %v1216
        %v1222 = vadd.f32 %v1190, %v1218
        %v1223 = vstv %s239
        %v1224 = vmul.f32 %v1223, %v1074
        %v1225 = vmul.f32 %v1223, %v1076
        %v1226 = vmul.f32 %v1223, %v1078
        %v1230 = vrot.slane %v1224, 5
        %v1231 = vrot.slane %v1225, 5
        %v1232 = vsel %vm800, %v1230, %v1231
        %v1233 = vrot.slane %v1226, 5
        %v1234 = vsel %vm800, %v1231, %v1233
        %v1237 = vadd.f32 %v1205, %v1232
        %v1238 = vadd.f32 %v1206, %v1234
        %v1239 = vstv %s288
        %v1240 = vmul.f32 %v1239, %v1080
        %v1241 = vmul.f32 %v1239, %v1082
        %v1242 = vmul.f32 %v1239, %v1084
        %v1246 = vrot.slane %v1240, 5
        %v1247 = vrot.slane %v1241, 5
        %v1248 = vsel %vm800, %v1246, %v1247
        %v1249 = vrot.slane %v1242, 5
        %v1250 = vsel %vm800, %v1247, %v1249
        %v1253 = vadd.f32 %v1221, %v1248
        %v1254 = vadd.f32 %v1222, %v1250
        %v1255 = vstv %s246
        %v1256 = vmul.f32 %v1255, %v1074
        %v1257 = vmul.f32 %v1255, %v1076
        %v1258 = vmul.f32 %v1255, %v1078
        %v1262 = vrot.slane %v1256, 6
        %v1263 = vrot.slane %v1257, 6
        %v1264 = vsel %vm833, %v1262, %v1263
        %v1265 = vrot.slane %v1258, 6
        %v1266 = vsel %vm833, %v1263, %v1265
        %v1269 = vadd.f32 %v1237, %v1264
        %v1270 = vadd.f32 %v1238, %v1266
        %v1271 = vstv %s295
        %v1272 = vmul.f32 %v1271, %v1080
        %v1273 = vmul.f32 %v1271, %v1082
        %v1274 = vmul.f32 %v1271, %v1084
        %v1278 = vrot.slane %v1272, 6
        %v1279 = vrot.slane %v1273, 6
        %v1280 = vsel %vm833, %v1278, %v1279
        %v1281 = vrot.slane %v1274, 6
        %v1282 = vsel %vm833, %v1279, %v1281
        %v1285 = vadd.f32 %v1253, %v1280
        %v1286 = vadd.f32 %v1254, %v1282
        %v1287 = vstv %s205
        %v1288 = vmul.f32 %v1287, %v634
        %v1289 = vmul.f32 %v1287, %v635
        %v1290 = vadd.f32 %v1269, %v1288
        %v1291 = vadd.f32 %v1270, %v1289
        %v1292 = vstv %s254
        %v1293 = vmul.f32 %v1292, %v637
        %v1294 = vmul.f32 %v1292, %v638
        %v1295 = vadd.f32 %v1285, %v1293
        %v1296 = vadd.f32 %v1286, %v1294
        %v1297 = vstv %s212
        %v1298 = vmul.f32 %v1297, %v634
        %v1299 = vmul.f32 %v1297, %v635
        %v1300 = vmul.f32 %v1297, %v636
        %v1304 = vrot.slane %v1298, 1
        %v1305 = vrot.slane %v1299, 1
        %v1306 = vsel %vm669, %v1304, %v1305
        %v1307 = vrot.slane %v1300, 1
        %v1308 = vsel %vm669, %v1305, %v1307
        %v1311 = vadd.f32 %v1290, %v1306
        %v1312 = vadd.f32 %v1291, %v1308
        %v1313 = vstv %s261
        %v1314 = vmul.f32 %v1313, %v637
        %v1315 = vmul.f32 %v1313, %v638
        %v1316 = vmul.f32 %v1313, %v639
        %v1320 = vrot.slane %v1314, 1
        %v1321 = vrot.slane %v1315, 1
        %v1322 = vsel %vm669, %v1320, %v1321
        %v1323 = vrot.slane %v1316, 1
        %v1324 = vsel %vm669, %v1321, %v1323
        %v1327 = vadd.f32 %v1295, %v1322
        %v1328 = vadd.f32 %v1296, %v1324
        %v1329 = vstv %s219
        %v1330 = vmul.f32 %v1329, %v634
        %v1331 = vmul.f32 %v1329, %v635
        %v1332 = vmul.f32 %v1329, %v636
        %v1336 = vrot.slane %v1330, 2
        %v1337 = vrot.slane %v1331, 2
        %v1338 = vsel %vm702, %v1336, %v1337
        %v1339 = vrot.slane %v1332, 2
        %v1340 = vsel %vm702, %v1337, %v1339
        %v1343 = vadd.f32 %v1311, %v1338
        %v1344 = vadd.f32 %v1312, %v1340
        %v1345 = vstv %s268
        %v1346 = vmul.f32 %v1345, %v637
        %v1347 = vmul.f32 %v1345, %v638
        %v1348 = vmul.f32 %v1345, %v639
        %v1352 = vrot.slane %v1346, 2
        %v1353 = vrot.slane %v1347, 2
        %v1354 = vsel %vm702, %v1352, %v1353
        %v1355 = vrot.slane %v1348, 2
        %v1356 = vsel %vm702, %v1353, %v1355
        %v1359 = vadd.f32 %v1327, %v1354
        %v1360 = vadd.f32 %v1328, %v1356
        %v1361 = vstv %s226
        %v1362 = vmul.f32 %v1361, %v634
        %v1363 = vmul.f32 %v1361, %v635
        %v1364 = vmul.f32 %v1361, %v636
        %v1368 = vrot.slane %v1362, 3
        %v1369 = vrot.slane %v1363, 3
        %v1370 = vsel %vm735, %v1368, %v1369
        %v1371 = vrot.slane %v1364, 3
        %v1372 = vsel %vm735, %v1369, %v1371
        %v1375 = vadd.f32 %v1343, %v1370
        %v1376 = vadd.f32 %v1344, %v1372
        %v1377 = vstv %s275
        %v1378 = vmul.f32 %v1377, %v637
        %v1379 = vmul.f32 %v1377, %v638
        %v1380 = vmul.f32 %v1377, %v639
        %v1384 = vrot.slane %v1378, 3
        %v1385 = vrot.slane %v1379, 3
        %v1386 = vsel %vm735, %v1384, %v1385
        %v1387 = vrot.slane %v1380, 3
        %v1388 = vsel %vm735, %v1385, %v1387
        %v1391 = vadd.f32 %v1359, %v1386
        %v1392 = vadd.f32 %v1360, %v1388
        %v1393 = vstv %s233
        %v1394 = vmul.f32 %v1393, %v634
        %v1395 = vmul.f32 %v1393, %v635
        %v1396 = vmul.f32 %v1393, %v636
        %v1400 = vrot.slane %v1394, 4
        %v1401 = vrot.slane %v1395, 4
        %v1402 = vsel %vm305, %v1400, %v1401
        %v1403 = vrot.slane %v1396, 4
        %v1404 = vsel %vm305, %v1401, %v1403
        %v1407 = vadd.f32 %v1375, %v1402
        %v1408 = vadd.f32 %v1376, %v1404
        %v1409 = vstv %s282
        %v1410 = vmul.f32 %v1409, %v637
        %v1411 = vmul.f32 %v1409, %v638
        %v1412 = vmul.f32 %v1409, %v639
        %v1416 = vrot.slane %v1410, 4
        %v1417 = vrot.slane %v1411, 4
        %v1418 = vsel %vm305, %v1416, %v1417
        %v1419 = vrot.slane %v1412, 4
        %v1420 = vsel %vm305, %v1417, %v1419
        %v1423 = vadd.f32 %v1391, %v1418
        %v1424 = vadd.f32 %v1392, %v1420
        %v1425 = vstv %s240
        %v1426 = vmul.f32 %v1425, %v634
        %v1427 = vmul.f32 %v1425, %v635
        %v1428 = vmul.f32 %v1425, %v636
        %v1432 = vrot.slane %v1426, 5
        %v1433 = vrot.slane %v1427, 5
        %v1434 = vsel %vm800, %v1432, %v1433
        %v1435 = vrot.slane %v1428, 5
        %v1436 = vsel %vm800, %v1433, %v1435
        %v1439 = vadd.f32 %v1407, %v1434
        %v1440 = vadd.f32 %v1408, %v1436
        %v1441 = vstv %s289
        %v1442 = vmul.f32 %v1441, %v637
        %v1443 = vmul.f32 %v1441, %v638
        %v1444 = vmul.f32 %v1441, %v639
        %v1448 = vrot.slane %v1442, 5
        %v1449 = vrot.slane %v1443, 5
        %v1450 = vsel %vm800, %v1448, %v1449
        %v1451 = vrot.slane %v1444, 5
        %v1452 = vsel %vm800, %v1449, %v1451
        %v1455 = vadd.f32 %v1423, %v1450
        %v1456 = vadd.f32 %v1424, %v1452
        %v1457 = vstv %s247
        %v1458 = vmul.f32 %v1457, %v634
        %v1459 = vmul.f32 %v1457, %v635
        %v1460 = vmul.f32 %v1457, %v636
        %v1464 = vrot.slane %v1458, 6
        %v1465 = vrot.slane %v1459, 6
        %v1466 = vsel %vm833, %v1464, %v1465
        %v1467 = vrot.slane %v1460, 6
        %v1468 = vsel %vm833, %v1465, %v1467
        %v1471 = vadd.f32 %v1439, %v1466
        %v1472 = vadd.f32 %v1440, %v1468
        %v1473 = vstv %s296
        %v1474 = vmul.f32 %v1473, %v637
        %v1475 = vmul.f32 %v1473, %v638
        %v1476 = vmul.f32 %v1473, %v639
        %v1480 = vrot.slane %v1474, 6
        %v1481 = vrot.slane %v1475, 6
        %v1482 = vsel %vm833, %v1480, %v1481
        %v1483 = vrot.slane %v1476, 6
        %v1484 = vsel %vm833, %v1481, %v1483
        %v1487 = vadd.f32 %v1455, %v1482
        %v1488 = vadd.f32 %v1456, %v1484
        %1489 = vrot.lane.b32.xlu0 %v634, 127
        %v1490 = vpop.permute.xlu0 %1489
        %1491 = vrot.lane.b32.xlu0 %v635, 127
        %v1492 = vpop.permute.xlu0 %1491
        %1493 = vrot.lane.b32.xlu0 %v636, 127
        %v1494 = vpop.permute.xlu0 %1493
        %1495 = vrot.lane.b32.xlu0 %v637, 127
        %v1496 = vpop.permute.xlu0 %1495
        %1497 = vrot.lane.b32.xlu0 %v638, 127
        %v1498 = vpop.permute.xlu0 %1497
        %1499 = vrot.lane.b32.xlu0 %v639, 127
        %v1500 = vpop.permute.xlu0 %1499
        %v1501 = vstv %s206
        %v1502 = vmul.f32 %v1501, %v1490
        %v1503 = vmul.f32 %v1501, %v1492
        %v1504 = vadd.f32 %v1471, %v1502
        %v1505 = vadd.f32 %v1472, %v1503
        %v1506 = vstv %s255
        %v1507 = vmul.f32 %v1506, %v1496
        %v1508 = vmul.f32 %v1506, %v1498
        %v1509 = vadd.f32 %v1487, %v1507
        %v1510 = vadd.f32 %v1488, %v1508
        %v1511 = vstv %s213
        %v1512 = vmul.f32 %v1511, %v1490
        %v1513 = vmul.f32 %v1511, %v1492
        %v1514 = vmul.f32 %v1511, %v1494
        %v1518 = vrot.slane %v1512, 1
        %v1519 = vrot.slane %v1513, 1
        %v1520 = vsel %vm669, %v1518, %v1519
        %v1521 = vrot.slane %v1514, 1
        %v1522 = vsel %vm669, %v1519, %v1521
        %v1525 = vadd.f32 %v1504, %v1520
        %v1526 = vadd.f32 %v1505, %v1522
        %v1527 = vstv %s262
        %v1528 = vmul.f32 %v1527, %v1496
        %v1529 = vmul.f32 %v1527, %v1498
        %v1530 = vmul.f32 %v1527, %v1500
        %v1534 = vrot.slane %v1528, 1
        %v1535 = vrot.slane %v1529, 1
        %v1536 = vsel %vm669, %v1534, %v1535
        %v1537 = vrot.slane %v1530, 1
        %v1538 = vsel %vm669, %v1535, %v1537
        %v1541 = vadd.f32 %v1509, %v1536
        %v1542 = vadd.f32 %v1510, %v1538
        %v1543 = vstv %s220
        %v1544 = vmul.f32 %v1543, %v1490
        %v1545 = vmul.f32 %v1543, %v1492
        %v1546 = vmul.f32 %v1543, %v1494
        %v1550 = vrot.slane %v1544, 2
        %v1551 = vrot.slane %v1545, 2
        %v1552 = vsel %vm702, %v1550, %v1551
        %v1553 = vrot.slane %v1546, 2
        %v1554 = vsel %vm702, %v1551, %v1553
        %v1557 = vadd.f32 %v1525, %v1552
        %v1558 = vadd.f32 %v1526, %v1554
        %v1559 = vstv %s269
        %v1560 = vmul.f32 %v1559, %v1496
        %v1561 = vmul.f32 %v1559, %v1498
        %v1562 = vmul.f32 %v1559, %v1500
        %v1566 = vrot.slane %v1560, 2
        %v1567 = vrot.slane %v1561, 2
        %v1568 = vsel %vm702, %v1566, %v1567
        %v1569 = vrot.slane %v1562, 2
        %v1570 = vsel %vm702, %v1567, %v1569
        %v1573 = vadd.f32 %v1541, %v1568
        %v1574 = vadd.f32 %v1542, %v1570
        %v1575 = vstv %s227
        %v1576 = vmul.f32 %v1575, %v1490
        %v1577 = vmul.f32 %v1575, %v1492
        %v1578 = vmul.f32 %v1575, %v1494
        %v1582 = vrot.slane %v1576, 3
        %v1583 = vrot.slane %v1577, 3
        %v1584 = vsel %vm735, %v1582, %v1583
        %v1585 = vrot.slane %v1578, 3
        %v1586 = vsel %vm735, %v1583, %v1585
        %v1589 = vadd.f32 %v1557, %v1584
        %v1590 = vadd.f32 %v1558, %v1586
        %v1591 = vstv %s276
        %v1592 = vmul.f32 %v1591, %v1496
        %v1593 = vmul.f32 %v1591, %v1498
        %v1594 = vmul.f32 %v1591, %v1500
        %v1598 = vrot.slane %v1592, 3
        %v1599 = vrot.slane %v1593, 3
        %v1600 = vsel %vm735, %v1598, %v1599
        %v1601 = vrot.slane %v1594, 3
        %v1602 = vsel %vm735, %v1599, %v1601
        %v1605 = vadd.f32 %v1573, %v1600
        %v1606 = vadd.f32 %v1574, %v1602
        %v1607 = vstv %s234
        %v1608 = vmul.f32 %v1607, %v1490
        %v1609 = vmul.f32 %v1607, %v1492
        %v1610 = vmul.f32 %v1607, %v1494
        %v1614 = vrot.slane %v1608, 4
        %v1615 = vrot.slane %v1609, 4
        %v1616 = vsel %vm305, %v1614, %v1615
        %v1617 = vrot.slane %v1610, 4
        %v1618 = vsel %vm305, %v1615, %v1617
        %v1621 = vadd.f32 %v1589, %v1616
        %v1622 = vadd.f32 %v1590, %v1618
        %v1623 = vstv %s283
        %v1624 = vmul.f32 %v1623, %v1496
        %v1625 = vmul.f32 %v1623, %v1498
        %v1626 = vmul.f32 %v1623, %v1500
        %v1630 = vrot.slane %v1624, 4
        %v1631 = vrot.slane %v1625, 4
        %v1632 = vsel %vm305, %v1630, %v1631
        %v1633 = vrot.slane %v1626, 4
        %v1634 = vsel %vm305, %v1631, %v1633
        %v1637 = vadd.f32 %v1605, %v1632
        %v1638 = vadd.f32 %v1606, %v1634
        %v1639 = vstv %s241
        %v1640 = vmul.f32 %v1639, %v1490
        %v1641 = vmul.f32 %v1639, %v1492
        %v1642 = vmul.f32 %v1639, %v1494
        %v1646 = vrot.slane %v1640, 5
        %v1647 = vrot.slane %v1641, 5
        %v1648 = vsel %vm800, %v1646, %v1647
        %v1649 = vrot.slane %v1642, 5
        %v1650 = vsel %vm800, %v1647, %v1649
        %v1653 = vadd.f32 %v1621, %v1648
        %v1654 = vadd.f32 %v1622, %v1650
        %v1655 = vstv %s290
        %v1656 = vmul.f32 %v1655, %v1496
        %v1657 = vmul.f32 %v1655, %v1498
        %v1658 = vmul.f32 %v1655, %v1500
        %v1662 = vrot.slane %v1656, 5
        %v1663 = vrot.slane %v1657, 5
        %v1664 = vsel %vm800, %v1662, %v1663
        %v1665 = vrot.slane %v1658, 5
        %v1666 = vsel %vm800, %v1663, %v1665
        %v1669 = vadd.f32 %v1637, %v1664
        %v1670 = vadd.f32 %v1638, %v1666
        %v1671 = vstv %s248
        %v1672 = vmul.f32 %v1671, %v1490
        %v1673 = vmul.f32 %v1671, %v1492
        %v1674 = vmul.f32 %v1671, %v1494
        %v1678 = vrot.slane %v1672, 6
        %v1679 = vrot.slane %v1673, 6
        %v1680 = vsel %vm833, %v1678, %v1679
        %v1681 = vrot.slane %v1674, 6
        %v1682 = vsel %vm833, %v1679, %v1681
        %v1685 = vadd.f32 %v1653, %v1680
        %v1686 = vadd.f32 %v1654, %v1682
        %v1687 = vstv %s297
        %v1688 = vmul.f32 %v1687, %v1496
        %v1689 = vmul.f32 %v1687, %v1498
        %v1690 = vmul.f32 %v1687, %v1500
        %v1694 = vrot.slane %v1688, 6
        %v1695 = vrot.slane %v1689, 6
        %v1696 = vsel %vm833, %v1694, %v1695
        %v1697 = vrot.slane %v1690, 6
        %v1698 = vsel %vm833, %v1695, %v1697
        %v1701 = vadd.f32 %v1669, %v1696
        %v1702 = vadd.f32 %v1670, %v1698
        %1703 = vrot.lane.b32.xlu0 %v634, 126
        %v1704 = vpop.permute.xlu0 %1703
        %1705 = vrot.lane.b32.xlu0 %v635, 126
        %v1706 = vpop.permute.xlu0 %1705
        %1707 = vrot.lane.b32.xlu0 %v636, 126
        %v1708 = vpop.permute.xlu0 %1707
        %1709 = vrot.lane.b32.xlu0 %v637, 126
        %v1710 = vpop.permute.xlu0 %1709
        %1711 = vrot.lane.b32.xlu0 %v638, 126
        %v1712 = vpop.permute.xlu0 %1711
        %1713 = vrot.lane.b32.xlu0 %v639, 126
        %v1714 = vpop.permute.xlu0 %1713
        %v1715 = vstv %s207
        %v1716 = vmul.f32 %v1715, %v1704
        %v1717 = vmul.f32 %v1715, %v1706
        %v1718 = vadd.f32 %v1685, %v1716
        %v1719 = vadd.f32 %v1686, %v1717
        %v1720 = vstv %s256
        %v1721 = vmul.f32 %v1720, %v1710
        %v1722 = vmul.f32 %v1720, %v1712
        %v1723 = vadd.f32 %v1701, %v1721
        %v1724 = vadd.f32 %v1702, %v1722
        %v1725 = vstv %s214
        %v1726 = vmul.f32 %v1725, %v1704
        %v1727 = vmul.f32 %v1725, %v1706
        %v1728 = vmul.f32 %v1725, %v1708
        %v1732 = vrot.slane %v1726, 1
        %v1733 = vrot.slane %v1727, 1
        %v1734 = vsel %vm669, %v1732, %v1733
        %v1735 = vrot.slane %v1728, 1
        %v1736 = vsel %vm669, %v1733, %v1735
        %v1739 = vadd.f32 %v1718, %v1734
        %v1740 = vadd.f32 %v1719, %v1736
        %v1741 = vstv %s263
        %v1742 = vmul.f32 %v1741, %v1710
        %v1743 = vmul.f32 %v1741, %v1712
        %v1744 = vmul.f32 %v1741, %v1714
        %v1748 = vrot.slane %v1742, 1
        %v1749 = vrot.slane %v1743, 1
        %v1750 = vsel %vm669, %v1748, %v1749
        %v1751 = vrot.slane %v1744, 1
        %v1752 = vsel %vm669, %v1749, %v1751
        %v1755 = vadd.f32 %v1723, %v1750
        %v1756 = vadd.f32 %v1724, %v1752
        %v1757 = vstv %s221
        %v1758 = vmul.f32 %v1757, %v1704
        %v1759 = vmul.f32 %v1757, %v1706
        %v1760 = vmul.f32 %v1757, %v1708
        %v1764 = vrot.slane %v1758, 2
        %v1765 = vrot.slane %v1759, 2
        %v1766 = vsel %vm702, %v1764, %v1765
        %v1767 = vrot.slane %v1760, 2
        %v1768 = vsel %vm702, %v1765, %v1767
        %v1771 = vadd.f32 %v1739, %v1766
        %v1772 = vadd.f32 %v1740, %v1768
        %v1773 = vstv %s270
        %v1774 = vmul.f32 %v1773, %v1710
        %v1775 = vmul.f32 %v1773, %v1712
        %v1776 = vmul.f32 %v1773, %v1714
        %v1780 = vrot.slane %v1774, 2
        %v1781 = vrot.slane %v1775, 2
        %v1782 = vsel %vm702, %v1780, %v1781
        %v1783 = vrot.slane %v1776, 2
        %v1784 = vsel %vm702, %v1781, %v1783
        %v1787 = vadd.f32 %v1755, %v1782
        %v1788 = vadd.f32 %v1756, %v1784
        %v1789 = vstv %s228
        %v1790 = vmul.f32 %v1789, %v1704
        %v1791 = vmul.f32 %v1789, %v1706
        %v1792 = vmul.f32 %v1789, %v1708
        %v1796 = vrot.slane %v1790, 3
        %v1797 = vrot.slane %v1791, 3
        %v1798 = vsel %vm735, %v1796, %v1797
        %v1799 = vrot.slane %v1792, 3
        %v1800 = vsel %vm735, %v1797, %v1799
        %v1803 = vadd.f32 %v1771, %v1798
        %v1804 = vadd.f32 %v1772, %v1800
        %v1805 = vstv %s277
        %v1806 = vmul.f32 %v1805, %v1710
        %v1807 = vmul.f32 %v1805, %v1712
        %v1808 = vmul.f32 %v1805, %v1714
        %v1812 = vrot.slane %v1806, 3
        %v1813 = vrot.slane %v1807, 3
        %v1814 = vsel %vm735, %v1812, %v1813
        %v1815 = vrot.slane %v1808, 3
        %v1816 = vsel %vm735, %v1813, %v1815
        %v1819 = vadd.f32 %v1787, %v1814
        %v1820 = vadd.f32 %v1788, %v1816
        %v1821 = vstv %s235
        %v1822 = vmul.f32 %v1821, %v1704
        %v1823 = vmul.f32 %v1821, %v1706
        %v1824 = vmul.f32 %v1821, %v1708
        %v1828 = vrot.slane %v1822, 4
        %v1829 = vrot.slane %v1823, 4
        %v1830 = vsel %vm305, %v1828, %v1829
        %v1831 = vrot.slane %v1824, 4
        %v1832 = vsel %vm305, %v1829, %v1831
        %v1835 = vadd.f32 %v1803, %v1830
        %v1836 = vadd.f32 %v1804, %v1832
        %v1837 = vstv %s284
        %v1838 = vmul.f32 %v1837, %v1710
        %v1839 = vmul.f32 %v1837, %v1712
        %v1840 = vmul.f32 %v1837, %v1714
        %v1844 = vrot.slane %v1838, 4
        %v1845 = vrot.slane %v1839, 4
        %v1846 = vsel %vm305, %v1844, %v1845
        %v1847 = vrot.slane %v1840, 4
        %v1848 = vsel %vm305, %v1845, %v1847
        %v1851 = vadd.f32 %v1819, %v1846
        %v1852 = vadd.f32 %v1820, %v1848
        %v1853 = vstv %s242
        %v1854 = vmul.f32 %v1853, %v1704
        %v1855 = vmul.f32 %v1853, %v1706
        %v1856 = vmul.f32 %v1853, %v1708
        %v1860 = vrot.slane %v1854, 5
        %v1861 = vrot.slane %v1855, 5
        %v1862 = vsel %vm800, %v1860, %v1861
        %v1863 = vrot.slane %v1856, 5
        %v1864 = vsel %vm800, %v1861, %v1863
        %v1867 = vadd.f32 %v1835, %v1862
        %v1868 = vadd.f32 %v1836, %v1864
        %v1869 = vstv %s291
        %v1870 = vmul.f32 %v1869, %v1710
        %v1871 = vmul.f32 %v1869, %v1712
        %v1872 = vmul.f32 %v1869, %v1714
        %v1876 = vrot.slane %v1870, 5
        %v1877 = vrot.slane %v1871, 5
        %v1878 = vsel %vm800, %v1876, %v1877
        %v1879 = vrot.slane %v1872, 5
        %v1880 = vsel %vm800, %v1877, %v1879
        %v1883 = vadd.f32 %v1851, %v1878
        %v1884 = vadd.f32 %v1852, %v1880
        %v1885 = vstv %s249
        %v1886 = vmul.f32 %v1885, %v1704
        %v1887 = vmul.f32 %v1885, %v1706
        %v1888 = vmul.f32 %v1885, %v1708
        %v1892 = vrot.slane %v1886, 6
        %v1893 = vrot.slane %v1887, 6
        %v1894 = vsel %vm833, %v1892, %v1893
        %v1895 = vrot.slane %v1888, 6
        %v1896 = vsel %vm833, %v1893, %v1895
        %v1899 = vadd.f32 %v1867, %v1894
        %v1900 = vadd.f32 %v1868, %v1896
        %v1901 = vstv %s298
        %v1902 = vmul.f32 %v1901, %v1710
        %v1903 = vmul.f32 %v1901, %v1712
        %v1904 = vmul.f32 %v1901, %v1714
        %v1908 = vrot.slane %v1902, 6
        %v1909 = vrot.slane %v1903, 6
        %v1910 = vsel %vm833, %v1908, %v1909
        %v1911 = vrot.slane %v1904, 6
        %v1912 = vsel %vm833, %v1909, %v1911
        %v1915 = vadd.f32 %v1883, %v1910
        %v1916 = vadd.f32 %v1884, %v1912
        %1917 = vrot.lane.b32.xlu0 %v634, 125
        %v1918 = vpop.permute.xlu0 %1917
        %1919 = vrot.lane.b32.xlu0 %v635, 125
        %v1920 = vpop.permute.xlu0 %1919
        %1921 = vrot.lane.b32.xlu0 %v636, 125
        %v1922 = vpop.permute.xlu0 %1921
        %1923 = vrot.lane.b32.xlu0 %v637, 125
        %v1924 = vpop.permute.xlu0 %1923
        %1925 = vrot.lane.b32.xlu0 %v638, 125
        %v1926 = vpop.permute.xlu0 %1925
        %1927 = vrot.lane.b32.xlu0 %v639, 125
        %v1928 = vpop.permute.xlu0 %1927
        %v1929 = vstv %s208
        %v1930 = vmul.f32 %v1929, %v1918
        %v1931 = vmul.f32 %v1929, %v1920
        %v1932 = vadd.f32 %v1899, %v1930
        %v1933 = vadd.f32 %v1900, %v1931
        %v1934 = vstv %s257
        %v1935 = vmul.f32 %v1934, %v1924
        %v1936 = vmul.f32 %v1934, %v1926
        %v1937 = vadd.f32 %v1915, %v1935
        %v1938 = vadd.f32 %v1916, %v1936
        %v1939 = vstv %s215
        %v1940 = vmul.f32 %v1939, %v1918
        %v1941 = vmul.f32 %v1939, %v1920
        %v1942 = vmul.f32 %v1939, %v1922
        %v1946 = vrot.slane %v1940, 1
        %v1947 = vrot.slane %v1941, 1
        %v1948 = vsel %vm669, %v1946, %v1947
        %v1949 = vrot.slane %v1942, 1
        %v1950 = vsel %vm669, %v1947, %v1949
        %v1953 = vadd.f32 %v1932, %v1948
        %v1954 = vadd.f32 %v1933, %v1950
        %v1955 = vstv %s264
        %v1956 = vmul.f32 %v1955, %v1924
        %v1957 = vmul.f32 %v1955, %v1926
        %v1958 = vmul.f32 %v1955, %v1928
        %v1962 = vrot.slane %v1956, 1
        %v1963 = vrot.slane %v1957, 1
        %v1964 = vsel %vm669, %v1962, %v1963
        %v1965 = vrot.slane %v1958, 1
        %v1966 = vsel %vm669, %v1963, %v1965
        %v1969 = vadd.f32 %v1937, %v1964
        %v1970 = vadd.f32 %v1938, %v1966
        %v1971 = vstv %s222
        %v1972 = vmul.f32 %v1971, %v1918
        %v1973 = vmul.f32 %v1971, %v1920
        %v1974 = vmul.f32 %v1971, %v1922
        %v1978 = vrot.slane %v1972, 2
        %v1979 = vrot.slane %v1973, 2
        %v1980 = vsel %vm702, %v1978, %v1979
        %v1981 = vrot.slane %v1974, 2
        %v1982 = vsel %vm702, %v1979, %v1981
        %v1985 = vadd.f32 %v1953, %v1980
        %v1986 = vadd.f32 %v1954, %v1982
        %v1987 = vstv %s271
        %v1988 = vmul.f32 %v1987, %v1924
        %v1989 = vmul.f32 %v1987, %v1926
        %v1990 = vmul.f32 %v1987, %v1928
        %v1994 = vrot.slane %v1988, 2
        %v1995 = vrot.slane %v1989, 2
        %v1996 = vsel %vm702, %v1994, %v1995
        %v1997 = vrot.slane %v1990, 2
        %v1998 = vsel %vm702, %v1995, %v1997
        %v2001 = vadd.f32 %v1969, %v1996
        %v2002 = vadd.f32 %v1970, %v1998
        %v2003 = vstv %s229
        %v2004 = vmul.f32 %v2003, %v1918
        %v2005 = vmul.f32 %v2003, %v1920
        %v2006 = vmul.f32 %v2003, %v1922
        %v2010 = vrot.slane %v2004, 3
        %v2011 = vrot.slane %v2005, 3
        %v2012 = vsel %vm735, %v2010, %v2011
        %v2013 = vrot.slane %v2006, 3
        %v2014 = vsel %vm735, %v2011, %v2013
        %v2017 = vadd.f32 %v1985, %v2012
        %v2018 = vadd.f32 %v1986, %v2014
        %v2019 = vstv %s278
        %v2020 = vmul.f32 %v2019, %v1924
        %v2021 = vmul.f32 %v2019, %v1926
        %v2022 = vmul.f32 %v2019, %v1928
        %v2026 = vrot.slane %v2020, 3
        %v2027 = vrot.slane %v2021, 3
        %v2028 = vsel %vm735, %v2026, %v2027
        %v2029 = vrot.slane %v2022, 3
        %v2030 = vsel %vm735, %v2027, %v2029
        %v2033 = vadd.f32 %v2001, %v2028
        %v2034 = vadd.f32 %v2002, %v2030
        %v2035 = vstv %s236
        %v2036 = vmul.f32 %v2035, %v1918
        %v2037 = vmul.f32 %v2035, %v1920
        %v2038 = vmul.f32 %v2035, %v1922
        %v2042 = vrot.slane %v2036, 4
        %v2043 = vrot.slane %v2037, 4
        %v2044 = vsel %vm305, %v2042, %v2043
        %v2045 = vrot.slane %v2038, 4
        %v2046 = vsel %vm305, %v2043, %v2045
        %v2049 = vadd.f32 %v2017, %v2044
        %v2050 = vadd.f32 %v2018, %v2046
        %v2051 = vstv %s285
        %v2052 = vmul.f32 %v2051, %v1924
        %v2053 = vmul.f32 %v2051, %v1926
        %v2054 = vmul.f32 %v2051, %v1928
        %v2058 = vrot.slane %v2052, 4
        %v2059 = vrot.slane %v2053, 4
        %v2060 = vsel %vm305, %v2058, %v2059
        %v2061 = vrot.slane %v2054, 4
        %v2062 = vsel %vm305, %v2059, %v2061
        %v2065 = vadd.f32 %v2033, %v2060
        %v2066 = vadd.f32 %v2034, %v2062
        %v2067 = vstv %s243
        %v2068 = vmul.f32 %v2067, %v1918
        %v2069 = vmul.f32 %v2067, %v1920
        %v2070 = vmul.f32 %v2067, %v1922
        %v2074 = vrot.slane %v2068, 5
        %v2075 = vrot.slane %v2069, 5
        %v2076 = vsel %vm800, %v2074, %v2075
        %v2077 = vrot.slane %v2070, 5
        %v2078 = vsel %vm800, %v2075, %v2077
        %v2081 = vadd.f32 %v2049, %v2076
        %v2082 = vadd.f32 %v2050, %v2078
        %v2083 = vstv %s292
        %v2084 = vmul.f32 %v2083, %v1924
        %v2085 = vmul.f32 %v2083, %v1926
        %v2086 = vmul.f32 %v2083, %v1928
        %v2090 = vrot.slane %v2084, 5
        %v2091 = vrot.slane %v2085, 5
        %v2092 = vsel %vm800, %v2090, %v2091
        %v2093 = vrot.slane %v2086, 5
        %v2094 = vsel %vm800, %v2091, %v2093
        %v2097 = vadd.f32 %v2065, %v2092
        %v2098 = vadd.f32 %v2066, %v2094
        %v2099 = vstv %s250
        %v2100 = vmul.f32 %v2099, %v1918
        %v2101 = vmul.f32 %v2099, %v1920
        %v2102 = vmul.f32 %v2099, %v1922
        %v2106 = vrot.slane %v2100, 6
        %v2107 = vrot.slane %v2101, 6
        %v2108 = vsel %vm833, %v2106, %v2107
        %v2109 = vrot.slane %v2102, 6
        %v2110 = vsel %vm833, %v2107, %v2109
        %v2113 = vadd.f32 %v2081, %v2108
        %v2114 = vadd.f32 %v2082, %v2110
        %v2115 = vstv %s299
        %v2116 = vmul.f32 %v2115, %v1924
        %v2117 = vmul.f32 %v2115, %v1926
        %v2118 = vmul.f32 %v2115, %v1928
        %v2122 = vrot.slane %v2116, 6
        %v2123 = vrot.slane %v2117, 6
        %v2124 = vsel %vm833, %v2122, %v2123
        %v2125 = vrot.slane %v2118, 6
        %v2126 = vsel %vm833, %v2123, %v2125
        %v2129 = vadd.f32 %v2097, %v2124
        %v2130 = vadd.f32 %v2098, %v2126
        %v2131 = vadd.f32 %v2113, %v2129
        %v2132 = vadd.f32 %v2114, %v2130
        %v2133 = vstv %s300
        %v2134 = vadd.f32 %v2131, %v2133
        %v2135 = vadd.f32 %v2132, %v2133
        %v2136 = vxor.u32 %v2134, 2147483648
        %v2137 = vxor.u32 %v2135, 2147483648
        %v2138 = vmul.f32 %v2136, 1.442695
        %v2139 = vpow.pop %v2138
        %v2140 = vmul.f32 %v2137, 1.442695
        %v2141 = vpow.pop %v2140
        %v2142 = vadd.f32 %v2139, 1.0
        %v2143 = vadd.f32 %v2141, 1.0
        %v2144 = vrcp.pop %v2142
        %v2145 = vmul.f32 1.0, %v2144
        %v2146 = vrcp.pop %v2143
        %v2147 = vmul.f32 1.0, %v2146
        %v2148 = vcombine.high %v2145, 0.0
        %v2150 = vunpack.c.l.s4 1983009808
        %v2151 = vunpack.c.0.s8 %v2150
        %v2152 = vlaneseq
        %v2153 = vshrl.u32 %v2152, 7
        %v2154 = vsub.s32 %v2151, %v2153
        %v2155 = vrot.slane %v2145, %v2154
        %v2157 = vunpack.c.l.s4 1983009808
        %v2158 = vunpack.c.0.s8 %v2157
        %v2159 = vlaneseq
        %v2160 = vshrl.u32 %v2159, 7
        %v2161 = vsub.s32 %v2158, %v2160
        %v2162 = vrot.slane %v2148, %v2161
        %v2163 = vcombine.high %v2155, 0.0
        %v2165 = vunpack.c.l.s4 1934713408
        %v2166 = vunpack.c.0.s8 %v2165
        %v2167 = vlaneseq
        %v2168 = vshrl.u32 %v2167, 7
        %v2169 = vsub.s32 %v2166, %v2168
        %v2170 = vrot.slane %v2155, %v2169
        %v2172 = vunpack.c.l.s4 1934713408
        %v2173 = vunpack.c.0.s8 %v2172
        %v2174 = vlaneseq
        %v2175 = vshrl.u32 %v2174, 7
        %v2176 = vsub.s32 %v2173, %v2175
        %v2177 = vrot.slane %v2163, %v2176
        %v2178 = vcombine.high %v2162, 0.0
        %v2180 = vunpack.c.l.s4 1934713408
        %v2181 = vunpack.c.0.s8 %v2180
        %v2182 = vlaneseq
        %v2183 = vshrl.u32 %v2182, 7
        %v2184 = vsub.s32 %v2181, %v2183
        %v2185 = vrot.slane %v2162, %v2184
        %v2187 = vunpack.c.l.s4 1934713408
        %v2188 = vunpack.c.0.s8 %v2187
        %v2189 = vlaneseq
        %v2190 = vshrl.u32 %v2189, 7
        %v2191 = vsub.s32 %v2188, %v2190
        %v2192 = vrot.slane %v2178, %v2191
        %v2193 = vcombine.high %v2170, 0.0
        %v2194 = vcombine.high %v2177, 0.0
        %v2195 = vcombine.high %v2185, 0.0
        %v2196 = vcombine.high %v2192, 0.0
        %v2197 = vcombine.high %v2147, 0.0
        %v2199 = vunpack.c.l.s4 1983009808
        %v2200 = vunpack.c.0.s8 %v2199
        %v2201 = vlaneseq
        %v2202 = vshrl.u32 %v2201, 7
        %v2203 = vsub.s32 %v2200, %v2202
        %v2204 = vrot.slane %v2147, %v2203
        %v2206 = vunpack.c.l.s4 1983009808
        %v2207 = vunpack.c.0.s8 %v2206
        %v2208 = vlaneseq
        %v2209 = vshrl.u32 %v2208, 7
        %v2210 = vsub.s32 %v2207, %v2209
        %v2211 = vrot.slane %v2197, %v2210
        %v2212 = vcombine.high %v2204, 0.0
        %v2214 = vunpack.c.l.s4 1934713408
        %v2215 = vunpack.c.0.s8 %v2214
        %v2216 = vlaneseq
        %v2217 = vshrl.u32 %v2216, 7
        %v2218 = vsub.s32 %v2215, %v2217
        %v2219 = vrot.slane %v2204, %v2218
        %v2221 = vunpack.c.l.s4 1934713408
        %v2222 = vunpack.c.0.s8 %v2221
        %v2223 = vlaneseq
        %v2224 = vshrl.u32 %v2223, 7
        %v2225 = vsub.s32 %v2222, %v2224
        %v2226 = vrot.slane %v2212, %v2225
        %v2227 = vcombine.high %v2211, 0.0
        %v2229 = vunpack.c.l.s4 1934713408
        %v2230 = vunpack.c.0.s8 %v2229
        %v2231 = vlaneseq
        %v2232 = vshrl.u32 %v2231, 7
        %v2233 = vsub.s32 %v2230, %v2232
        %v2234 = vrot.slane %v2211, %v2233
        %v2236 = vunpack.c.l.s4 1934713408
        %v2237 = vunpack.c.0.s8 %v2236
        %v2238 = vlaneseq
        %v2239 = vshrl.u32 %v2238, 7
        %v2240 = vsub.s32 %v2237, %v2239
        %v2241 = vrot.slane %v2227, %v2240
        %v2242 = vcombine.high %v2219, 0.0
        %v2243 = vcombine.high %v2226, 0.0
        %v2244 = vcombine.high %v2234, 0.0
        %v2245 = vcombine.high %v2241, 0.0
        %2247 = vrot.lane.b32.xlu0 %v2193, 16
        %v2248 = vpop.permute.xlu0 %2247
        %2251 = vrot.lane.b32.xlu0 %v2177, 32
        %v2252 = vpop.permute.xlu0 %2251
        %2255 = vrot.lane.b32.xlu0 %v2194, 48
        %v2256 = vpop.permute.xlu0 %2255
        %2259 = vrot.lane.b32.xlu0 %v2185, 64
        %v2260 = vpop.permute.xlu0 %2259
        %2263 = vrot.lane.b32.xlu0 %v2195, 80
        %v2264 = vpop.permute.xlu0 %2263
        %2267 = vrot.lane.b32.xlu0 %v2192, 96
        %v2268 = vpop.permute.xlu0 %2267
        %2271 = vrot.lane.b32.xlu0 %v2196, 112
        %v2272 = vpop.permute.xlu0 %2271
        %2275 = vrot.lane.b32.xlu0 %v2242, 16
        %v2276 = vpop.permute.xlu0 %2275
        %2279 = vrot.lane.b32.xlu0 %v2226, 32
        %v2280 = vpop.permute.xlu0 %2279
        %2283 = vrot.lane.b32.xlu0 %v2243, 48
        %v2284 = vpop.permute.xlu0 %2283
        %2287 = vrot.lane.b32.xlu0 %v2234, 64
        %v2288 = vpop.permute.xlu0 %2287
        %2291 = vrot.lane.b32.xlu0 %v2244, 80
        %v2292 = vpop.permute.xlu0 %2291
        %2295 = vrot.lane.b32.xlu0 %v2241, 96
        %v2296 = vpop.permute.xlu0 %2295
        %2299 = vrot.lane.b32.xlu0 %v2245, 112
        %v2300 = vpop.permute.xlu0 %2299
        %v2302 = vsel %vm629, %v2170, %v2248
        %vm2303 = vcmask 261120
        %v2304 = vsel %vm2303, %v2302, %v2252
        %vm2305 = vcmask 392192
        %v2306 = vsel %vm2305, %v2304, %v2256
        %vm2307 = vcmask 523264
        %v2308 = vsel %vm2307, %v2306, %v2260
        %vm2309 = vcmask 654336
        %v2310 = vsel %vm2309, %v2308, %v2264
        %vm2311 = vcmask 785408
        %v2312 = vsel %vm2311, %v2310, %v2268
        %vm2313 = vcmask 916480
        %v2314 = vsel %vm2313, %v2312, %v2272
        %v2315 = vsel %vm629, %v2219, %v2276
        %v2316 = vsel %vm2303, %v2315, %v2280
        %v2317 = vsel %vm2305, %v2316, %v2284
        %v2318 = vsel %vm2307, %v2317, %v2288
        %v2319 = vsel %vm2309, %v2318, %v2292
        %v2320 = vsel %vm2311, %v2319, %v2296
        %v2321 = vsel %vm2313, %v2320, %v2300
        %v2322 = vld [vmem:[%s178] sm:$0xff]
        %v2323 = vlaneseq
        %v2324 = vshrl.u32 %v2323, 7
        %v2325 = vsub.s32 0, %v2324
        %v2326 = vrot.slane %v2314, %v2325
        %v2327 = vlaneseq
        %v2328 = vshrl.u32 %v2327, 7
        %v2329 = vsub.s32 0, %v2328
        %v2330 = vrot.slane %v2321, %v2329
        %v2332 = vcombine.high %v2322, %v2322
        %v2334 = vmul.f32 %v2326, %v2322
        %v2335 = vmul.f32 %v2330, %v2332
        %v2338 = vcombine.low %v2334, %v2335
        %2340 = vst [vmem:[%s201] sm:$0xff] %v2338
        %s2341 = sand.u32 %s98, 1
        %s2342 = scalar_lea.sflag [#allocation7], %s2341
        %s2343 = sand.u32 %s98, 1
        %s2344 = smul.addr %s2343, 8
        %s2345 = scalar_lea.vmem [#allocation10], %s2344
        // Predicated region
        $region41: #{tpu_custom_call.1} parent=31 // pred_check
          %p2346 = pneg %p108
        $region42: #{tpu_custom_call.1} parent=31 // pred_check_branch
          %2348 = sbr.rel (%p2346) target = $region44
        $region43: #{tpu_custom_call.1} parent=31 // pred_region
          %s2350 = ssub.s32 128, 128
          %2351 = vsyncadd %s2342, %s2350
          %s2352 = smul.addr %s22, 2
          %s2353 = smul.addr %s2352, 64
          %s2354 = scalar_lea.hbm %s3, %s2353
          %s2356 = sshll.u32 %s2345, 4
          %s2357 = int_to_ptr.vmem [resolvable:$true] %s2356
          %2359 = dma.vmem_to_hbm [thread:$0]  %s2357, 128, %s2354, %s2342
        $region44: #{tpu_custom_call.1} parent=31 // pred_fallthru
          _
      $region32: #{tpu_custom_call.1} parent=5 // pred_fallthru
        _
      %p2360 = scmp.le.s32.totalorder 2, %s17
      // Predicated region
      $region45: #{tpu_custom_call.1} parent=5 // pred_check
        %p2361 = pneg %p2360
      $region46: #{tpu_custom_call.1} parent=5 // pred_check_branch
        %2363 = sbr.rel (%p2361) target = $region48
      $region47: #{tpu_custom_call.1} parent=5 // pred_region
        %s2364 = ssub.s32 %s17, 2
        // Predicated region
        $region49: #{tpu_custom_call.1} parent=47 // pred_check
          %p2365 = pneg %p114
        $region50: #{tpu_custom_call.1} parent=47 // pred_check_branch
          %2367 = sbr.rel (%p2365) target = $region52
        $region51: #{tpu_custom_call.1} parent=47 // pred_region
          %s2368 = sand.u32 %s99, 1
          %s2369 = scalar_lea.sflag [#allocation7], %s2368
          %s2370 = sand.u32 %s99, 1
          %s2371 = smul.addr %s2370, 8
          %s2372 = scalar_lea.vmem [#allocation10], %s2371
          %2373 = dma.done %s2369, 128
        $region52: #{tpu_custom_call.1} parent=47 // pred_fallthru
          _
      $region48: #{tpu_custom_call.1} parent=5 // pred_fallthru
        _
    $region6: #{tpu_custom_call.1} parent=1 // loop_footer
      %s21 = sadd.s32 1, %s17
    $region7: #{tpu_custom_call.1} parent=1 // loop_footer_branch
      %16 = sbr.rel target = $region3
    $region8: #{tpu_custom_call.1} parent=1 // loop_exit
      _
    %2374 = vsyncpa [#allocation6], 1
    %s2375 = scalar_lea.sflag [#allocation6], 1
    %2376 = vsyncpa %s2375, 1
    %2377 = vsyncpa [#allocation7], 1
    %s2378 = scalar_lea.sflag [#allocation7], 1
    %2379 = vsyncpa %s2378, 1
    %2380 = vsyncpa [#allocation8], 1
    %s2381 = scalar_lea.sflag [#allocation8], 1
    %2382 = vsyncpa %s2381, 1

</llo_original>
